<compile_context>
chip_gen: v6e
topology: v6e:2x2x1
jax: 0.10.0
libtpu: 0.0.40
codegen_flags: <defaults>
</compile_context>

<pallas_src>
import functools

import jax
import jax.numpy as jnp
from jax import lax
from jax.experimental import pallas as pl
from jax.experimental.pallas import tpu as pltpu


def _fused_basic_block_kernel(x_ref, w1_ref, w2_ref, b1_ref, b2_ref, m_ref,
                              o_ref, patch_ref, *, C, W, BLK, L):
    """One batch-tile of images per grid step.

    Ref shapes (L = b_tile * HW_P, HW_P = H*W rounded up to a multiple of 128):
      x_ref    : (C, L)       f32   channels on sublanes, (image, spatial) on lanes
      w1_ref   : (C, 9*BLK)   bf16  conv1 weight, tap-major, BN1 scale folded in,
                                    input-channel dim zero-padded to BLK
      w2_ref   : (C, 9*BLK)   bf16  conv2 weight (BN2 scale folded in)
      b*_ref   : (C, 1)       f32   folded eval-mode BatchNorm bias
      m_ref    : (9, L)       bf16  per-tap boundary masks (1 inside image, 0 outside)
      o_ref    : (C, L)
      patch_ref: VMEM (9*BLK, L) bf16 scratch -- shared im2col matrix for both convs
    """
    x = x_ref[...]                     # (C, L) f32 (also the residual)
    masks = m_ref[...]                 # (9, L) bf16

    # Zero only the (BLK - C) zero-pad rows of each tap block, and only when they
    # exist.  For real ResNet stages (C % 16 == 0) the nine tap stores already cover
    # every scratch row and this is skipped entirely.  When present it must be redone
    # every invocation (per-core scratch under megacore), but it is 9*(BLK-C) rows,
    # not the whole (9*BLK, L) scratch.
    if BLK != C:
        pad_zeros = jnp.zeros((BLK - C, L), jnp.bfloat16)
        for t in range(9):
            patch_ref[BLK * t + C:BLK * (t + 1), :] = pad_zeros

    def build_patch(a):                # a: (C, L) f32
        for kh in range(3):
            for kw in range(3):
                t = kh * 3 + kw
                s = (kh - 1) * W + (kw - 1)            # static python int
                # Lane rotation on the (otherwise idle) XLU slot:
                #   piece[:, j] = a[:, (j + s) % L]
                # Out-of-image / cross-image / pad-column reads are zeroed by the
                # per-tap mask.  Roll kept in f32; cast + mask in bf16 so the VPU
                # multiply runs on 16x128-packed vregs.
                piece = a if s == 0 else pltpu.roll(a, shift=(-s) % L, axis=1)
                piece = piece.astype(jnp.bfloat16)
                if t != 4:                             # center-tap mask is all ones
                    piece = piece * masks[t:t + 1, :]
                # 16-row-aligned partial store into the shared im2col scratch.
                patch_ref[BLK * t:BLK * t + C, :] = piece

    # conv1 as ONE MXU matmul (K = 9*BLK); BN1 scale already folded into w1; ReLU in f32.
    build_patch(x)
    y = jnp.dot(w1_ref[...], patch_ref[...], preferred_element_type=jnp.float32)
    y = jnp.maximum(y + b1_ref[...], 0.0)              # (C, L) f32

    # conv2 as ONE MXU matmul; BN2 scale folded; + bias + identity residual + ReLU.
    build_patch(y)
    z = jnp.dot(w2_ref[...], patch_ref[...], preferred_element_type=jnp.float32)
    z = jnp.maximum(z + b2_ref[...] + x, 0.0)

    o_ref[...] = z.astype(o_ref.dtype)


def basic_block_forward(x_nchw, params, eps=1e-5, b_tile=None):
    """BasicBlock forward: conv1 -> bn1 -> relu -> conv2 -> bn2 -> +identity -> relu.

    stride=1, downsample=None (in_channels == out_channels), groups=1, eval-mode BN.
    Both conv inputs are truncated to bf16 for the MXU (f32 accumulation), which is
    what the 5e-2 test tolerance accounts for.

    TODO(synk): the ResNet stem (7x7 stride-2 conv + 3x3 maxpool), stride-2 /
    downsample (conv1x1) BasicBlocks and training-mode BatchNorm (batch statistics)
    are not implemented in Pallas; this kernel covers the stride-1 identity
    BasicBlock that dominates the network.
    """
    (w1, g1, be1, m1, v1, w2, g2, be2, m2, v2) = params
    N, C, H, W = x_nchw.shape
    assert w1.shape[0] == C and w2.shape[0] == C, \
        "identity-residual BasicBlock requires in_channels == out_channels"

    HW = H * W
    HW_P = ((HW + 127) // 128) * 128     # lane-dense: pad flattened spatial to 128
    BLK = ((C + 15) // 16) * 16          # per-tap row pitch, bf16-tile aligned
    K = 9 * BLK

    # Batch tile: widest lane axis whose double-buffered working set stays well under
    # the 32 MiB default scoped-VMEM limit while keeping >= 2 grid steps so both v7x
    # TensorCores get work.
    if b_tile is None:
        budget = 20 << 20
        cap = max(1, N // 2)
        b_tile = 1
        for bt in range(1, cap + 1):
            if N % bt:
                continue
            L_ = bt * HW_P
            need = (2 * 2 * C * L_ * 4      # double-buffered x / out blocks (f32)
                    + K * L_ * 2            # im2col scratch (bf16)
                    + 2 * 2 * C * K * 2     # double-buffered packed weights (bf16)
                    + 2 * 9 * L_ * 2)       # double-buffered masks (bf16)
            if need <= budget:
                b_tile = bt
    assert N % b_tile == 0, "b_tile must divide the batch"
    L = b_tile * HW_P

    # Activations: NCHW -> (C, N*HW_P).  Pure layout plumbing (zero-pad of the lane
    # axis + transpose) so every in-kernel load/store is lane-dense.
    x = x_nchw.reshape(N, C, HW).astype(jnp.float32)
    if HW_P != HW:
        x = jnp.pad(x, ((0, 0), (0, 0), (0, HW_P - HW)))
    x = jnp.transpose(x, (1, 0, 2)).reshape(C, N * HW_P)

    # Fold eval-mode BatchNorm into per-channel scale/bias; the scale is folded into
    # the packed weights (one-time weight-side op), only the bias stays in-kernel.
    s1 = g1 / jnp.sqrt(v1 + eps)
    s2 = g2 / jnp.sqrt(v2 + eps)
    b1 = (be1 - m1 * s1).reshape(C, 1).astype(jnp.float32)
    b2 = (be2 - m2 * s2).reshape(C, 1).astype(jnp.float32)

    # Conv weights: OIHW -> (O, 9*BLK) bf16, tap-major, BN scale folded into output
    # rows, input-channel dim zero-padded to BLK (for real stages BLK == C, no pad).
    def pack_w(w, scale):
        wt = jnp.transpose(w, (0, 2, 3, 1)).reshape(C, 9, C)     # (O, kh*3+kw, I)
        wt = wt * scale.reshape(C, 1, 1)
        wt = jnp.pad(wt, ((0, 0), (0, 0), (0, BLK - C)))
        return wt.reshape(C, K).astype(jnp.bfloat16)

    w1_p = pack_w(w1, s1)
    w2_p = pack_w(w2, s2)

    # Per-tap validity masks over output positions (the conv's zero padding), bf16,
    # zero-extended over the lane pad and tiled across the b_tile images.
    hh, ww = jnp.meshgrid(jnp.arange(H), jnp.arange(W), indexing="ij")
    rows = []
    for kh in range(3):
        for kw in range(3):
            dh, dw = kh - 1, kw - 1
            valid = ((hh + dh >= 0) & (hh + dh < H)
                     & (ww + dw >= 0) & (ww + dw < W))
            rows.append(valid.reshape(HW))
    masks = jnp.stack(rows).astype(jnp.bfloat16)                 # (9, HW)
    if HW_P != HW:
        masks = jnp.pad(masks, ((0, 0), (0, HW_P - HW)))
    masks = jnp.tile(masks, (1, b_tile))                         # (9, L)

    kernel = functools.partial(_fused_basic_block_kernel, C=C, W=W, BLK=BLK, L=L)

    flops = 4 * 9 * C * C * HW * N                               # 2 convs, 2 flop/MAC
    bytes_accessed = (2 * N * C * HW_P * 4                       # x in + out (f32)
                      + 2 * C * K * 2 + 2 * C * 4 + 9 * L * 2)

    # TODO(synk): mark the grid-invariant operands (weights / biases / masks) as
    # single-buffered (pipeline_mode=pl.Buffered(1)) once verified on the target jax
    # version; at C=512 default double-buffering of the packed weights wastes ~19 MB
    # of VMEM (matters most against v7x's 64 MiB).
    out = pl.pallas_call(
        kernel,
        out_shape=jax.ShapeDtypeStruct((C, N * HW_P), x_nchw.dtype),
        grid_spec=pltpu.PrefetchScalarGridSpec(
            num_scalar_prefetch=0,
            grid=(N // b_tile,),
            in_specs=[
                pl.BlockSpec((C, L), lambda n: (0, n)),   # x (also the residual)
                pl.BlockSpec((C, K), lambda n: (0, 0)),   # w1 (BN1 scale folded)
                pl.BlockSpec((C, K), lambda n: (0, 0)),   # w2 (BN2 scale folded)
                pl.BlockSpec((C, 1), lambda n: (0, 0)),   # b1
                pl.BlockSpec((C, 1), lambda n: (0, 0)),   # b2
                pl.BlockSpec((9, L), lambda n: (0, 0)),   # boundary masks
            ],
            out_specs=pl.BlockSpec((C, L), lambda n: (0, n)),
            scratch_shapes=[pltpu.VMEM((K, L), jnp.bfloat16)],   # shared im2col scratch
        ),
        compiler_params=pltpu.CompilerParams(
            dimension_semantics=("parallel",)),
        cost_estimate=pl.CostEstimate(flops=int(flops), transcendentals=0,
                                      bytes_accessed=int(bytes_accessed)),
    )(x, w1_p, w2_p, b1, b2, masks)

    out = out.reshape(C, N, HW_P)
    out = jnp.transpose(out, (1, 0, 2))[:, :, :HW]
    return out.reshape(N, C, H, W)


def _reference_forward(x_nchw, params, eps=1e-5):
    """Pure-JAX reference (mirrors the PyTorch forward with eval-mode BN)."""
    (w1, g1, be1, m1, v1, w2, g2, be2, m2, v2) = params
    x = jnp.transpose(x_nchw, (0, 2, 3, 1))
    w1_k = jnp.transpose(w1, (2, 3, 1, 0))
    w2_k = jnp.transpose(w2, (2, 3, 1, 0))
    dn = ("NHWC", "HWIO", "NHWC")

    def bn(y, g, be, m, v):
        s = g / jnp.sqrt(v + eps)
        return y * s + (be - m * s)

    y = lax.conv_general_dilated(x, w1_k, (1, 1), "SAME", dimension_numbers=dn)
    y = jnp.maximum(bn(y, g1, be1, m1, v1), 0.0)
    y = lax.conv_general_dilated(y, w2_k, (1, 1), "SAME", dimension_numbers=dn)
    y = jnp.maximum(bn(y, g2, be2, m2, v2) + x, 0.0)
    return jnp.transpose(y, (0, 3, 1, 2))


if __name__ == "__main__":
    key = jax.random.PRNGKey(0)
    ks = jax.random.split(key, 11)

    N, C, H, W = 2, 4, 16, 16
    x = jax.random.normal(ks[0], (N, C, H, W), jnp.float32)

    # Deterministic synthetic parameters (PyTorch shapes: conv OIHW, BN (C,)).
    w1 = 0.1 * jax.random.normal(ks[1], (C, C, 3, 3), jnp.float32)
    w2 = 0.1 * jax.random.normal(ks[2], (C, C, 3, 3), jnp.float32)
    g1 = 1.0 + 0.1 * jax.random.normal(ks[3], (C,), jnp.float32)
    be1 = 0.1 * jax.random.normal(ks[4], (C,), jnp.float32)
    m1 = 0.1 * jax.random.normal(ks[5], (C,), jnp.float32)
    v1 = 0.5 + jnp.abs(jax.random.normal(ks[6], (C,), jnp.float32))
    g2 = 1.0 + 0.1 * jax.random.normal(ks[7], (C,), jnp.float32)
    be2 = 0.1 * jax.random.normal(ks[8], (C,), jnp.float32)
    m2 = 0.1 * jax.random.normal(ks[9], (C,), jnp.float32)
    v2 = 0.5 + jnp.abs(jax.random.normal(ks[10], (C,), jnp.float32))

    params = (w1, g1, be1, m1, v1, w2, g2, be2, m2, v2)

    ref = _reference_forward(x, params)

    # Exercise both the one-image-per-step and the batch-tiled lane layouts.
    for bt in (1, 2):
        out = basic_block_forward(x, params, b_tile=bt)
        out = jax.block_until_ready(out)
        assert out.shape == (N, C, H, W)
        assert jnp.allclose(out, ref, atol=5e-2, rtol=5e-2), (
            f"b_tile={bt}: max abs diff = {jnp.max(jnp.abs(out - ref))}")

    print("KERNEL_OK")
</pallas_src>

<mosaic_0001>
module attributes {stable_mosaic.version = 11 : i64} {
  func.func @_fused_basic_block_kernel(%arg0: i32, %arg1: memref<4x256xf32, #tpu.memory_space<vmem>>, %arg2: memref<4x144xbf16, #tpu.memory_space<vmem>>, %arg3: memref<4x144xbf16, #tpu.memory_space<vmem>>, %arg4: memref<4x1xf32, #tpu.memory_space<vmem>>, %arg5: memref<4x1xf32, #tpu.memory_space<vmem>>, %arg6: memref<9x256xbf16, #tpu.memory_space<vmem>>, %arg7: memref<4x256xf32, #tpu.memory_space<vmem>>, %arg8: memref<144x256xbf16, #tpu.memory_space<vmem>>) attributes {dimension_semantics = [#tpu.dimension_semantics<parallel>], iteration_bounds = array<i64: 2>, scalar_prefetch = 0 : i64, scratch_operands = 1 : i64, tpu.core_type = #tpu.core_type<tc>, window_params = [{transform_indices = @transform_0, window_bounds = array<i64: 4, 256>}, {pipeline_mode = #tpu.pipeline_mode<synchronous>, transform_indices = @transform_1, window_bounds = array<i64: 4, 144>}, {pipeline_mode = #tpu.pipeline_mode<synchronous>, transform_indices = @transform_2, window_bounds = array<i64: 4, 144>}, {pipeline_mode = #tpu.pipeline_mode<synchronous>, transform_indices = @transform_3, window_bounds = array<i64: 4, 1>}, {pipeline_mode = #tpu.pipeline_mode<synchronous>, transform_indices = @transform_4, window_bounds = array<i64: 4, 1>}, {pipeline_mode = #tpu.pipeline_mode<synchronous>, transform_indices = @transform_5, window_bounds = array<i64: 9, 256>}, {transform_indices = @transform_6, window_bounds = array<i64: 4, 256>}]} {
    %c0 = arith.constant 0 : index
    %c0_0 = arith.constant 0 : index
    %0 = vector.load %arg1[%c0, %c0_0] : memref<4x256xf32, #tpu.memory_space<vmem>>, vector<4x256xf32>
    %c0_1 = arith.constant 0 : index
    %c0_2 = arith.constant 0 : index
    %1 = vector.load %arg6[%c0_1, %c0_2] : memref<9x256xbf16, #tpu.memory_space<vmem>>, vector<9x256xbf16>
    %cst = arith.constant 0.000000e+00 : bf16
    %2 = vector.broadcast %cst : bf16 to vector<12x256xbf16>
    %c4 = arith.constant 4 : index
    %c0_3 = arith.constant 0 : index
    %3 = vector.load %arg8[%c4, %c0_3] : memref<144x256xbf16, #tpu.memory_space<vmem>>, vector<12x256xbf16>
    tpu.vector_store %arg8[%c4, %c0_3], %2 {strides = array<i32>} : memref<144x256xbf16, #tpu.memory_space<vmem>>, vector<12x256xbf16>,
    %c20 = arith.constant 20 : index
    %c0_4 = arith.constant 0 : index
    %4 = vector.load %arg8[%c20, %c0_4] : memref<144x256xbf16, #tpu.memory_space<vmem>>, vector<12x256xbf16>
    tpu.vector_store %arg8[%c20, %c0_4], %2 {strides = array<i32>} : memref<144x256xbf16, #tpu.memory_space<vmem>>, vector<12x256xbf16>,
    %c36 = arith.constant 36 : index
    %c0_5 = arith.constant 0 : index
    %5 = vector.load %arg8[%c36, %c0_5] : memref<144x256xbf16, #tpu.memory_space<vmem>>, vector<12x256xbf16>
    tpu.vector_store %arg8[%c36, %c0_5], %2 {strides = array<i32>} : memref<144x256xbf16, #tpu.memory_space<vmem>>, vector<12x256xbf16>,
    %c52 = arith.constant 52 : index
    %c0_6 = arith.constant 0 : index
    %6 = vector.load %arg8[%c52, %c0_6] : memref<144x256xbf16, #tpu.memory_space<vmem>>, vector<12x256xbf16>
    tpu.vector_store %arg8[%c52, %c0_6], %2 {strides = array<i32>} : memref<144x256xbf16, #tpu.memory_space<vmem>>, vector<12x256xbf16>,
    %c68 = arith.constant 68 : index
    %c0_7 = arith.constant 0 : index
    %7 = vector.load %arg8[%c68, %c0_7] : memref<144x256xbf16, #tpu.memory_space<vmem>>, vector<12x256xbf16>
    tpu.vector_store %arg8[%c68, %c0_7], %2 {strides = array<i32>} : memref<144x256xbf16, #tpu.memory_space<vmem>>, vector<12x256xbf16>,
    %c84 = arith.constant 84 : index
    %c0_8 = arith.constant 0 : index
    %8 = vector.load %arg8[%c84, %c0_8] : memref<144x256xbf16, #tpu.memory_space<vmem>>, vector<12x256xbf16>
    tpu.vector_store %arg8[%c84, %c0_8], %2 {strides = array<i32>} : memref<144x256xbf16, #tpu.memory_space<vmem>>, vector<12x256xbf16>,
    %c100 = arith.constant 100 : index
    %c0_9 = arith.constant 0 : index
    %9 = vector.load %arg8[%c100, %c0_9] : memref<144x256xbf16, #tpu.memory_space<vmem>>, vector<12x256xbf16>
    tpu.vector_store %arg8[%c100, %c0_9], %2 {strides = array<i32>} : memref<144x256xbf16, #tpu.memory_space<vmem>>, vector<12x256xbf16>,
    %c116 = arith.constant 116 : index
    %c0_10 = arith.constant 0 : index
    %10 = vector.load %arg8[%c116, %c0_10] : memref<144x256xbf16, #tpu.memory_space<vmem>>, vector<12x256xbf16>
    tpu.vector_store %arg8[%c116, %c0_10], %2 {strides = array<i32>} : memref<144x256xbf16, #tpu.memory_space<vmem>>, vector<12x256xbf16>,
    %c132 = arith.constant 132 : index
    %c0_11 = arith.constant 0 : index
    %11 = vector.load %arg8[%c132, %c0_11] : memref<144x256xbf16, #tpu.memory_space<vmem>>, vector<12x256xbf16>
    tpu.vector_store %arg8[%c132, %c0_11], %2 {strides = array<i32>} : memref<144x256xbf16, #tpu.memory_space<vmem>>, vector<12x256xbf16>,
    %c17_i32 = arith.constant 17 : i32
    %12 = tpu.dynamic_rotate %0 by %c17_i32 dim 1 : vector<4x256xf32>, i32 -> vector<4x256xf32>
    %13 = arith.truncf %12 : vector<4x256xf32> to vector<4x256xbf16>
    %14 = vector.extract_strided_slice %1 {offsets = [0, 0], sizes = [1, 256], strides = [1, 1]} : vector<9x256xbf16> to vector<1x256xbf16>
    %15 = vector.broadcast %14 : vector<1x256xbf16> to vector<4x256xbf16>
    %16 = arith.mulf %13, %15 : vector<4x256xbf16>
    %c0_12 = arith.constant 0 : index
    %c0_13 = arith.constant 0 : index
    %17 = vector.load %arg8[%c0_12, %c0_13] : memref<144x256xbf16, #tpu.memory_space<vmem>>, vector<4x256xbf16>
    tpu.vector_store %arg8[%c0_12, %c0_13], %16 {strides = array<i32>} : memref<144x256xbf16, #tpu.memory_space<vmem>>, vector<4x256xbf16>,
    %c16_i32 = arith.constant 16 : i32
    %18 = tpu.dynamic_rotate %0 by %c16_i32 dim 1 : vector<4x256xf32>, i32 -> vector<4x256xf32>
    %19 = arith.truncf %18 : vector<4x256xf32> to vector<4x256xbf16>
    %20 = vector.extract_strided_slice %1 {offsets = [1, 0], sizes = [1, 256], strides = [1, 1]} : vector<9x256xbf16> to vector<1x256xbf16>
    %21 = vector.broadcast %20 : vector<1x256xbf16> to vector<4x256xbf16>
    %22 = arith.mulf %19, %21 : vector<4x256xbf16>
    %c16 = arith.constant 16 : index
    %c0_14 = arith.constant 0 : index
    %23 = vector.load %arg8[%c16, %c0_14] : memref<144x256xbf16, #tpu.memory_space<vmem>>, vector<4x256xbf16>
    tpu.vector_store %arg8[%c16, %c0_14], %22 {strides = array<i32>} : memref<144x256xbf16, #tpu.memory_space<vmem>>, vector<4x256xbf16>,
    %c15_i32 = arith.constant 15 : i32
    %24 = tpu.dynamic_rotate %0 by %c15_i32 dim 1 : vector<4x256xf32>, i32 -> vector<4x256xf32>
    %25 = arith.truncf %24 : vector<4x256xf32> to vector<4x256xbf16>
    %26 = vector.extract_strided_slice %1 {offsets = [2, 0], sizes = [1, 256], strides = [1, 1]} : vector<9x256xbf16> to vector<1x256xbf16>
    %27 = vector.broadcast %26 : vector<1x256xbf16> to vector<4x256xbf16>
    %28 = arith.mulf %25, %27 : vector<4x256xbf16>
    %c32 = arith.constant 32 : index
    %c0_15 = arith.constant 0 : index
    %29 = vector.load %arg8[%c32, %c0_15] : memref<144x256xbf16, #tpu.memory_space<vmem>>, vector<4x256xbf16>
    tpu.vector_store %arg8[%c32, %c0_15], %28 {strides = array<i32>} : memref<144x256xbf16, #tpu.memory_space<vmem>>, vector<4x256xbf16>,
    %c1_i32 = arith.constant 1 : i32
    %30 = tpu.dynamic_rotate %0 by %c1_i32 dim 1 : vector<4x256xf32>, i32 -> vector<4x256xf32>
    %31 = arith.truncf %30 : vector<4x256xf32> to vector<4x256xbf16>
    %32 = vector.extract_strided_slice %1 {offsets = [3, 0], sizes = [1, 256], strides = [1, 1]} : vector<9x256xbf16> to vector<1x256xbf16>
    %33 = vector.broadcast %32 : vector<1x256xbf16> to vector<4x256xbf16>
    %34 = arith.mulf %31, %33 : vector<4x256xbf16>
    %c48 = arith.constant 48 : index
    %c0_16 = arith.constant 0 : index
    %35 = vector.load %arg8[%c48, %c0_16] : memref<144x256xbf16, #tpu.memory_space<vmem>>, vector<4x256xbf16>
    tpu.vector_store %arg8[%c48, %c0_16], %34 {strides = array<i32>} : memref<144x256xbf16, #tpu.memory_space<vmem>>, vector<4x256xbf16>,
    %36 = arith.truncf %0 : vector<4x256xf32> to vector<4x256xbf16>
    %c64 = arith.constant 64 : index
    %c0_17 = arith.constant 0 : index
    %37 = vector.load %arg8[%c64, %c0_17] : memref<144x256xbf16, #tpu.memory_space<vmem>>, vector<4x256xbf16>
    tpu.vector_store %arg8[%c64, %c0_17], %36 {strides = array<i32>} : memref<144x256xbf16, #tpu.memory_space<vmem>>, vector<4x256xbf16>,
    %c255_i32 = arith.constant 255 : i32
    %38 = tpu.dynamic_rotate %0 by %c255_i32 dim 1 : vector<4x256xf32>, i32 -> vector<4x256xf32>
    %39 = arith.truncf %38 : vector<4x256xf32> to vector<4x256xbf16>
    %40 = vector.extract_strided_slice %1 {offsets = [5, 0], sizes = [1, 256], strides = [1, 1]} : vector<9x256xbf16> to vector<1x256xbf16>
    %41 = vector.broadcast %40 : vector<1x256xbf16> to vector<4x256xbf16>
    %42 = arith.mulf %39, %41 : vector<4x256xbf16>
    %c80 = arith.constant 80 : index
    %c0_18 = arith.constant 0 : index
    %43 = vector.load %arg8[%c80, %c0_18] : memref<144x256xbf16, #tpu.memory_space<vmem>>, vector<4x256xbf16>
    tpu.vector_store %arg8[%c80, %c0_18], %42 {strides = array<i32>} : memref<144x256xbf16, #tpu.memory_space<vmem>>, vector<4x256xbf16>,
    %c241_i32 = arith.constant 241 : i32
    %44 = tpu.dynamic_rotate %0 by %c241_i32 dim 1 : vector<4x256xf32>, i32 -> vector<4x256xf32>
    %45 = arith.truncf %44 : vector<4x256xf32> to vector<4x256xbf16>
    %46 = vector.extract_strided_slice %1 {offsets = [6, 0], sizes = [1, 256], strides = [1, 1]} : vector<9x256xbf16> to vector<1x256xbf16>
    %47 = vector.broadcast %46 : vector<1x256xbf16> to vector<4x256xbf16>
    %48 = arith.mulf %45, %47 : vector<4x256xbf16>
    %c96 = arith.constant 96 : index
    %c0_19 = arith.constant 0 : index
    %49 = vector.load %arg8[%c96, %c0_19] : memref<144x256xbf16, #tpu.memory_space<vmem>>, vector<4x256xbf16>
    tpu.vector_store %arg8[%c96, %c0_19], %48 {strides = array<i32>} : memref<144x256xbf16, #tpu.memory_space<vmem>>, vector<4x256xbf16>,
    %c240_i32 = arith.constant 240 : i32
    %50 = tpu.dynamic_rotate %0 by %c240_i32 dim 1 : vector<4x256xf32>, i32 -> vector<4x256xf32>
    %51 = arith.truncf %50 : vector<4x256xf32> to vector<4x256xbf16>
    %52 = vector.extract_strided_slice %1 {offsets = [7, 0], sizes = [1, 256], strides = [1, 1]} : vector<9x256xbf16> to vector<1x256xbf16>
    %53 = vector.broadcast %52 : vector<1x256xbf16> to vector<4x256xbf16>
    %54 = arith.mulf %51, %53 : vector<4x256xbf16>
    %c112 = arith.constant 112 : index
    %c0_20 = arith.constant 0 : index
    %55 = vector.load %arg8[%c112, %c0_20] : memref<144x256xbf16, #tpu.memory_space<vmem>>, vector<4x256xbf16>
    tpu.vector_store %arg8[%c112, %c0_20], %54 {strides = array<i32>} : memref<144x256xbf16, #tpu.memory_space<vmem>>, vector<4x256xbf16>,
    %c239_i32 = arith.constant 239 : i32
    %56 = tpu.dynamic_rotate %0 by %c239_i32 dim 1 : vector<4x256xf32>, i32 -> vector<4x256xf32>
    %57 = arith.truncf %56 : vector<4x256xf32> to vector<4x256xbf16>
    %58 = vector.extract_strided_slice %1 {offsets = [8, 0], sizes = [1, 256], strides = [1, 1]} : vector<9x256xbf16> to vector<1x256xbf16>
    %59 = vector.broadcast %58 : vector<1x256xbf16> to vector<4x256xbf16>
    %60 = arith.mulf %57, %59 : vector<4x256xbf16>
    %c128 = arith.constant 128 : index
    %c0_21 = arith.constant 0 : index
    %61 = vector.load %arg8[%c128, %c0_21] : memref<144x256xbf16, #tpu.memory_space<vmem>>, vector<4x256xbf16>
    tpu.vector_store %arg8[%c128, %c0_21], %60 {strides = array<i32>} : memref<144x256xbf16, #tpu.memory_space<vmem>>, vector<4x256xbf16>,
    %c0_22 = arith.constant 0 : index
    %c0_23 = arith.constant 0 : index
    %62 = vector.load %arg2[%c0_22, %c0_23] : memref<4x144xbf16, #tpu.memory_space<vmem>>, vector<4x144xbf16>
    %c0_24 = arith.constant 0 : index
    %c0_25 = arith.constant 0 : index
    %63 = vector.load %arg8[%c0_24, %c0_25] : memref<144x256xbf16, #tpu.memory_space<vmem>>, vector<144x256xbf16>
    %cst_26 = arith.constant dense<0.000000e+00> : vector<4x256xf32>
    %64 = tpu.matmul %62, %63, %cst_26 {dimension_numbers = #tpu.dot_dimension_numbers<[1], [0], [0], [1], [0, 0, 1, 1], [], []>} : vector<4x144xbf16>, vector<144x256xbf16>, vector<4x256xf32> -> vector<4x256xf32>
    %c0_27 = arith.constant 0 : index
    %c0_28 = arith.constant 0 : index
    %65 = vector.load %arg4[%c0_27, %c0_28] : memref<4x1xf32, #tpu.memory_space<vmem>>, vector<4x1xf32>
    %66 = vector.broadcast %65 : vector<4x1xf32> to vector<4x256xf32>
    %67 = arith.addf %64, %66 : vector<4x256xf32>
    %cst_29 = arith.constant 0.000000e+00 : f32
    %68 = vector.broadcast %cst_29 : f32 to vector<4x256xf32>
    %69 = arith.maximumf %67, %68 : vector<4x256xf32>
    %c17_i32_30 = arith.constant 17 : i32
    %70 = tpu.dynamic_rotate %69 by %c17_i32_30 dim 1 : vector<4x256xf32>, i32 -> vector<4x256xf32>
    %71 = arith.truncf %70 : vector<4x256xf32> to vector<4x256xbf16>
    %72 = vector.extract_strided_slice %1 {offsets = [0, 0], sizes = [1, 256], strides = [1, 1]} : vector<9x256xbf16> to vector<1x256xbf16>
    %73 = vector.broadcast %72 : vector<1x256xbf16> to vector<4x256xbf16>
    %74 = arith.mulf %71, %73 : vector<4x256xbf16>
    %c0_31 = arith.constant 0 : index
    %c0_32 = arith.constant 0 : index
    %75 = vector.load %arg8[%c0_31, %c0_32] : memref<144x256xbf16, #tpu.memory_space<vmem>>, vector<4x256xbf16>
    tpu.vector_store %arg8[%c0_31, %c0_32], %74 {strides = array<i32>} : memref<144x256xbf16, #tpu.memory_space<vmem>>, vector<4x256xbf16>,
    %c16_i32_33 = arith.constant 16 : i32
    %76 = tpu.dynamic_rotate %69 by %c16_i32_33 dim 1 : vector<4x256xf32>, i32 -> vector<4x256xf32>
    %77 = arith.truncf %76 : vector<4x256xf32> to vector<4x256xbf16>
    %78 = vector.extract_strided_slice %1 {offsets = [1, 0], sizes = [1, 256], strides = [1, 1]} : vector<9x256xbf16> to vector<1x256xbf16>
    %79 = vector.broadcast %78 : vector<1x256xbf16> to vector<4x256xbf16>
    %80 = arith.mulf %77, %79 : vector<4x256xbf16>
    %c16_34 = arith.constant 16 : index
    %c0_35 = arith.constant 0 : index
    %81 = vector.load %arg8[%c16_34, %c0_35] : memref<144x256xbf16, #tpu.memory_space<vmem>>, vector<4x256xbf16>
    tpu.vector_store %arg8[%c16_34, %c0_35], %80 {strides = array<i32>} : memref<144x256xbf16, #tpu.memory_space<vmem>>, vector<4x256xbf16>,
    %c15_i32_36 = arith.constant 15 : i32
    %82 = tpu.dynamic_rotate %69 by %c15_i32_36 dim 1 : vector<4x256xf32>, i32 -> vector<4x256xf32>
    %83 = arith.truncf %82 : vector<4x256xf32> to vector<4x256xbf16>
    %84 = vector.extract_strided_slice %1 {offsets = [2, 0], sizes = [1, 256], strides = [1, 1]} : vector<9x256xbf16> to vector<1x256xbf16>
    %85 = vector.broadcast %84 : vector<1x256xbf16> to vector<4x256xbf16>
    %86 = arith.mulf %83, %85 : vector<4x256xbf16>
    %c32_37 = arith.constant 32 : index
    %c0_38 = arith.constant 0 : index
    %87 = vector.load %arg8[%c32_37, %c0_38] : memref<144x256xbf16, #tpu.memory_space<vmem>>, vector<4x256xbf16>
    tpu.vector_store %arg8[%c32_37, %c0_38], %86 {strides = array<i32>} : memref<144x256xbf16, #tpu.memory_space<vmem>>, vector<4x256xbf16>,
    %c1_i32_39 = arith.constant 1 : i32
    %88 = tpu.dynamic_rotate %69 by %c1_i32_39 dim 1 : vector<4x256xf32>, i32 -> vector<4x256xf32>
    %89 = arith.truncf %88 : vector<4x256xf32> to vector<4x256xbf16>
    %90 = vector.extract_strided_slice %1 {offsets = [3, 0], sizes = [1, 256], strides = [1, 1]} : vector<9x256xbf16> to vector<1x256xbf16>
    %91 = vector.broadcast %90 : vector<1x256xbf16> to vector<4x256xbf16>
    %92 = arith.mulf %89, %91 : vector<4x256xbf16>
    %c48_40 = arith.constant 48 : index
    %c0_41 = arith.constant 0 : index
    %93 = vector.load %arg8[%c48_40, %c0_41] : memref<144x256xbf16, #tpu.memory_space<vmem>>, vector<4x256xbf16>
    tpu.vector_store %arg8[%c48_40, %c0_41], %92 {strides = array<i32>} : memref<144x256xbf16, #tpu.memory_space<vmem>>, vector<4x256xbf16>,
    %94 = arith.truncf %69 : vector<4x256xf32> to vector<4x256xbf16>
    %c64_42 = arith.constant 64 : index
    %c0_43 = arith.constant 0 : index
    %95 = vector.load %arg8[%c64_42, %c0_43] : memref<144x256xbf16, #tpu.memory_space<vmem>>, vector<4x256xbf16>
    tpu.vector_store %arg8[%c64_42, %c0_43], %94 {strides = array<i32>} : memref<144x256xbf16, #tpu.memory_space<vmem>>, vector<4x256xbf16>,
    %c255_i32_44 = arith.constant 255 : i32
    %96 = tpu.dynamic_rotate %69 by %c255_i32_44 dim 1 : vector<4x256xf32>, i32 -> vector<4x256xf32>
    %97 = arith.truncf %96 : vector<4x256xf32> to vector<4x256xbf16>
    %98 = vector.extract_strided_slice %1 {offsets = [5, 0], sizes = [1, 256], strides = [1, 1]} : vector<9x256xbf16> to vector<1x256xbf16>
    %99 = vector.broadcast %98 : vector<1x256xbf16> to vector<4x256xbf16>
    %100 = arith.mulf %97, %99 : vector<4x256xbf16>
    %c80_45 = arith.constant 80 : index
    %c0_46 = arith.constant 0 : index
    %101 = vector.load %arg8[%c80_45, %c0_46] : memref<144x256xbf16, #tpu.memory_space<vmem>>, vector<4x256xbf16>
    tpu.vector_store %arg8[%c80_45, %c0_46], %100 {strides = array<i32>} : memref<144x256xbf16, #tpu.memory_space<vmem>>, vector<4x256xbf16>,
    %c241_i32_47 = arith.constant 241 : i32
    %102 = tpu.dynamic_rotate %69 by %c241_i32_47 dim 1 : vector<4x256xf32>, i32 -> vector<4x256xf32>
    %103 = arith.truncf %102 : vector<4x256xf32> to vector<4x256xbf16>
    %104 = vector.extract_strided_slice %1 {offsets = [6, 0], sizes = [1, 256], strides = [1, 1]} : vector<9x256xbf16> to vector<1x256xbf16>
    %105 = vector.broadcast %104 : vector<1x256xbf16> to vector<4x256xbf16>
    %106 = arith.mulf %103, %105 : vector<4x256xbf16>
    %c96_48 = arith.constant 96 : index
    %c0_49 = arith.constant 0 : index
    %107 = vector.load %arg8[%c96_48, %c0_49] : memref<144x256xbf16, #tpu.memory_space<vmem>>, vector<4x256xbf16>
    tpu.vector_store %arg8[%c96_48, %c0_49], %106 {strides = array<i32>} : memref<144x256xbf16, #tpu.memory_space<vmem>>, vector<4x256xbf16>,
    %c240_i32_50 = arith.constant 240 : i32
    %108 = tpu.dynamic_rotate %69 by %c240_i32_50 dim 1 : vector<4x256xf32>, i32 -> vector<4x256xf32>
    %109 = arith.truncf %108 : vector<4x256xf32> to vector<4x256xbf16>
    %110 = vector.extract_strided_slice %1 {offsets = [7, 0], sizes = [1, 256], strides = [1, 1]} : vector<9x256xbf16> to vector<1x256xbf16>
    %111 = vector.broadcast %110 : vector<1x256xbf16> to vector<4x256xbf16>
    %112 = arith.mulf %109, %111 : vector<4x256xbf16>
    %c112_51 = arith.constant 112 : index
    %c0_52 = arith.constant 0 : index
    %113 = vector.load %arg8[%c112_51, %c0_52] : memref<144x256xbf16, #tpu.memory_space<vmem>>, vector<4x256xbf16>
    tpu.vector_store %arg8[%c112_51, %c0_52], %112 {strides = array<i32>} : memref<144x256xbf16, #tpu.memory_space<vmem>>, vector<4x256xbf16>,
    %c239_i32_53 = arith.constant 239 : i32
    %114 = tpu.dynamic_rotate %69 by %c239_i32_53 dim 1 : vector<4x256xf32>, i32 -> vector<4x256xf32>
    %115 = arith.truncf %114 : vector<4x256xf32> to vector<4x256xbf16>
    %116 = vector.extract_strided_slice %1 {offsets = [8, 0], sizes = [1, 256], strides = [1, 1]} : vector<9x256xbf16> to vector<1x256xbf16>
    %117 = vector.broadcast %116 : vector<1x256xbf16> to vector<4x256xbf16>
    %118 = arith.mulf %115, %117 : vector<4x256xbf16>
    %c128_54 = arith.constant 128 : index
    %c0_55 = arith.constant 0 : index
    %119 = vector.load %arg8[%c128_54, %c0_55] : memref<144x256xbf16, #tpu.memory_space<vmem>>, vector<4x256xbf16>
    tpu.vector_store %arg8[%c128_54, %c0_55], %118 {strides = array<i32>} : memref<144x256xbf16, #tpu.memory_space<vmem>>, vector<4x256xbf16>,
    %c0_56 = arith.constant 0 : index
    %c0_57 = arith.constant 0 : index
    %120 = vector.load %arg3[%c0_56, %c0_57] : memref<4x144xbf16, #tpu.memory_space<vmem>>, vector<4x144xbf16>
    %c0_58 = arith.constant 0 : index
    %c0_59 = arith.constant 0 : index
    %121 = vector.load %arg8[%c0_58, %c0_59] : memref<144x256xbf16, #tpu.memory_space<vmem>>, vector<144x256xbf16>
    %cst_60 = arith.constant dense<0.000000e+00> : vector<4x256xf32>
    %122 = tpu.matmul %120, %121, %cst_60 {dimension_numbers = #tpu.dot_dimension_numbers<[1], [0], [0], [1], [0, 0, 1, 1], [], []>} : vector<4x144xbf16>, vector<144x256xbf16>, vector<4x256xf32> -> vector<4x256xf32>
    %c0_61 = arith.constant 0 : index
    %c0_62 = arith.constant 0 : index
    %123 = vector.load %arg5[%c0_61, %c0_62] : memref<4x1xf32, #tpu.memory_space<vmem>>, vector<4x1xf32>
    %124 = vector.broadcast %123 : vector<4x1xf32> to vector<4x256xf32>
    %125 = arith.addf %122, %124 : vector<4x256xf32>
    %126 = arith.addf %125, %0 : vector<4x256xf32>
    %cst_63 = arith.constant 0.000000e+00 : f32
    %127 = vector.broadcast %cst_63 : f32 to vector<4x256xf32>
    %128 = arith.maximumf %126, %127 : vector<4x256xf32>
    %c0_64 = arith.constant 0 : index
    %c0_65 = arith.constant 0 : index
    %129 = vector.load %arg7[%c0_64, %c0_65] : memref<4x256xf32, #tpu.memory_space<vmem>>, vector<4x256xf32>
    tpu.vector_store %arg7[%c0_64, %c0_65], %128 {strides = array<i32>} : memref<4x256xf32, #tpu.memory_space<vmem>>, vector<4x256xf32>,
    return
  }
  func.func @transform_0(%arg0: i32) -> (i32, i32) {
    %c0_i32 = arith.constant 0 : i32
    %c0_i32_0 = arith.constant 0 : i32
    return %c0_i32, %arg0 : i32, i32
  }
  func.func @transform_1(%arg0: i32) -> (i32, i32) {
    %c0_i32 = arith.constant 0 : i32
    %c0_i32_0 = arith.constant 0 : i32
    %c0_i32_1 = arith.constant 0 : i32
    return %c0_i32, %c0_i32_0 : i32, i32
  }
  func.func @transform_2(%arg0: i32) -> (i32, i32) {
    %c0_i32 = arith.constant 0 : i32
    %c0_i32_0 = arith.constant 0 : i32
    %c0_i32_1 = arith.constant 0 : i32
    return %c0_i32, %c0_i32_0 : i32, i32
  }
  func.func @transform_3(%arg0: i32) -> (i32, i32) {
    %c0_i32 = arith.constant 0 : i32
    %c0_i32_0 = arith.constant 0 : i32
    %c0_i32_1 = arith.constant 0 : i32
    return %c0_i32, %c0_i32_0 : i32, i32
  }
  func.func @transform_4(%arg0: i32) -> (i32, i32) {
    %c0_i32 = arith.constant 0 : i32
    %c0_i32_0 = arith.constant 0 : i32
    %c0_i32_1 = arith.constant 0 : i32
    return %c0_i32, %c0_i32_0 : i32, i32
  }
  func.func @transform_5(%arg0: i32) -> (i32, i32) {
    %c0_i32 = arith.constant 0 : i32
    %c0_i32_0 = arith.constant 0 : i32
    %c0_i32_1 = arith.constant 0 : i32
    return %c0_i32, %c0_i32_0 : i32, i32
  }
  func.func @transform_6(%arg0: i32) -> (i32, i32) {
    %c0_i32 = arith.constant 0 : i32
    %c0_i32_0 = arith.constant 0 : i32
    return %c0_i32, %arg0 : i32, i32
  }
}

</mosaic_0001>

<llo_original>
// kernel: tpu_custom_call.1
$region0: #{tpu_custom_call.1}
  #allocation0 [shape = 'u32[]', space=smem, size = 0x4, offset = 0x4, fixed_abs, tag = 'smem constant byte address 0x4 - core index']
  #allocation1 [shape = 'u32[144,128]{1,0:T(1,128)}', space=vmem, size = 0x12000, scoped, tag = 'internal scratch']
  #allocation2 [shape = 'bf16[144,256]{1,0:T(8,128)(2,1)}', space=vmem, size = 0x12000, scoped, tag = 'scratch operand']
  %s0 = inlined_call_operand.hbm [shape: f32[4,512], index: 0, kind: input, shape index: {}]
  %s1 = inlined_call_operand.hbm [shape: bf16[4,144], index: 1, kind: input, shape index: {}]
  %s2 = inlined_call_operand.hbm [shape: bf16[4,144], index: 2, kind: input, shape index: {}]
  %s3 = inlined_call_operand.vmem [shape: f32[4,1], index: 3, kind: input, shape index: {}]
  %s4 = inlined_call_operand.vmem [shape: f32[4,1], index: 4, kind: input, shape index: {}]
  %s5 = inlined_call_operand.vmem [shape: bf16[9,256], index: 5, kind: input, shape index: {}]
  %s6 = inlined_call_operand.hbm [shape: f32[4,512], index: 6, kind: output, shape index: {}]
  %s7 = sld [smem:[#allocation0]]
  $region69: #{tpu_custom_call.1} parent=0
    _
  %s9 = ssub.s32 1, %s7
  %s10 = scalar_select 0, %s9, %s7
  $region1: #{tpu_custom_call.1} parent=0
    #allocation3 [shape = 'u8[8192]{0}', space=vmem, size = 0x2000, scoped, tag = 'input window, operand 0']
    #allocation4 [shape = 's32[2]{0}', space=sflag, size = 0x8, scoped, tag = 'scoped memory for tpu_custom_call.1']
    #allocation5 [shape = 's32[2]{0}', space=sflag, size = 0x8, scoped, tag = 'scoped memory for tpu_custom_call.1']
    #allocation6 [shape = 'u8[2048]{0}', space=vmem, size = 0x800, scoped, tag = 'input window, operand 1, single buffered']
    #allocation7 [shape = 's32[1]{0}', space=sflag, size = 0x4, scoped, tag = 'scoped memory for tpu_custom_call.1']
    #allocation8 [shape = 'u8[2048]{0}', space=vmem, size = 0x800, scoped, tag = 'input window, operand 2, single buffered']
    #allocation9 [shape = 'u8[8192]{0}', space=vmem, size = 0x2000, scoped, tag = 'output window, operand 0']
    %11 = vsyncpa [#allocation4], 0
    %s12 = scalar_lea.sflag [#allocation4], 1
    %13 = vsyncpa %s12, 0
    %14 = vsyncpa [#allocation7], 0
    %15 = vsyncpa [#allocation5], 0
    %s16 = scalar_lea.sflag [#allocation5], 1
    %17 = vsyncpa %s16, 0
    loop: start=0, step=1, limit=4
    $region2: #{tpu_custom_call.1} parent=1 // loop_pre_header
      _
    $region3: #{tpu_custom_call.1} parent=1 // loop_header
      %s19 = sphi 0, %s23
      %p20 = scmp.ge.s32.totalorder %s19, 4
      %s29 = sphi 0, %s31
      %s32 = sphi 0, %s29
      %s33 = sphi 0, %s32
      %s49 = sphi 0, %s33
      %s53 = sphi 0, %s53
      %s55 = sphi 0, %s53
      %s56 = sphi 0, %s55
      %s70 = sphi 0, %s56
      %s74 = sphi 0, %s74
      %s76 = sphi 0, %s74
      %s77 = sphi 0, %s76
      %s91 = sphi 0, %s77
      %s95 = sphi 0, %s95
      %s97 = sphi 0, %s95
      %s98 = sphi 0, %s97
      %s112 = sphi 0, %s98
      %s116 = sphi 0, %s116
      %s118 = sphi 0, %s116
      %s119 = sphi 0, %s118
      %s133 = sphi 0, %s119
      %s137 = sphi 0, %s137
      %s139 = sphi 0, %s137
      %s140 = sphi 0, %s139
      %s154 = sphi 0, %s140
      %s160 = sphi 0, %s162
      %s163 = sphi 0, %s160
      %s164 = sphi 0, %s163
      %s180 = sphi 0, %s164
    $region4: #{tpu_custom_call.1} parent=1 // loop_header_branch
      %22 = sbr.rel (%p20) target = $region8
    $region5: #{tpu_custom_call.1} parent=1 // loop_body
      %s24 = ssub.s32 %s19, 1
      %s25 = ssub.s32 %s19, 2
      %s26 = sadd.s32 %s19, 1
      %s27 = ssub.s32 %s19, %s26
      %p28 = scmp.eq.s32.totalorder %s27, 0
      %s30 = sadd.s32 %s29, 1
      %s31 = scalar_select %p28, %s29, %s30
      %p34 = pneg %p28
      %p35 = scmp.eq.s32.totalorder %s19, 1
      %p36 = por %p34, %p35
      %p37 = scmp.ne.s32.totalorder %s29, %s32
      %p38 = scmp.eq.s32.totalorder %s19, 0
      %p39 = por %p37, %p38
      %p40 = scmp.ne.s32.totalorder %s29, %s32
      %p41 = scmp.eq.s32.totalorder %s24, 1
      %p42 = por %p40, %p41
      %p43 = scmp.ne.s32.totalorder %s32, %s33
      %p44 = scmp.eq.s32.totalorder %s24, 0
      %p45 = por %p43, %p44
      %p46 = scmp.ne.s32.totalorder %s32, %s33
      %p47 = scmp.eq.s32.totalorder %s25, 1
      %p48 = por %p46, %p47
      %p50 = scmp.ne.s32.totalorder %s33, %s49
      %p51 = scmp.eq.s32.totalorder %s25, 0
      %p52 = por %p50, %p51
      %s54 = sadd.s32 %s53, 1
      %p57 = scmp.eq.s32.totalorder %s19, 1
      %p58 = scmp.ne.s32.totalorder %s53, %s55
      %p59 = scmp.eq.s32.totalorder %s19, 0
      %p60 = por %p58, %p59
      %p61 = scmp.ne.s32.totalorder %s53, %s55
      %p62 = scmp.eq.s32.totalorder %s24, 1
      %p63 = por %p61, %p62
      %p64 = scmp.ne.s32.totalorder %s55, %s56
      %p65 = scmp.eq.s32.totalorder %s24, 0
      %p66 = por %p64, %p65
      %p67 = scmp.ne.s32.totalorder %s55, %s56
      %p68 = scmp.eq.s32.totalorder %s25, 1
      %p69 = por %p67, %p68
      %p71 = scmp.ne.s32.totalorder %s56, %s70
      %p72 = scmp.eq.s32.totalorder %s25, 0
      %p73 = por %p71, %p72
      %s75 = sadd.s32 %s74, 1
      %p78 = scmp.eq.s32.totalorder %s19, 1
      %p79 = scmp.ne.s32.totalorder %s74, %s76
      %p80 = scmp.eq.s32.totalorder %s19, 0
      %p81 = por %p79, %p80
      %p82 = scmp.ne.s32.totalorder %s74, %s76
      %p83 = scmp.eq.s32.totalorder %s24, 1
      %p84 = por %p82, %p83
      %p85 = scmp.ne.s32.totalorder %s76, %s77
      %p86 = scmp.eq.s32.totalorder %s24, 0
      %p87 = por %p85, %p86
      %p88 = scmp.ne.s32.totalorder %s76, %s77
      %p89 = scmp.eq.s32.totalorder %s25, 1
      %p90 = por %p88, %p89
      %p92 = scmp.ne.s32.totalorder %s77, %s91
      %p93 = scmp.eq.s32.totalorder %s25, 0
      %p94 = por %p92, %p93
      %s96 = sadd.s32 %s95, 1
      %p99 = scmp.eq.s32.totalorder %s19, 1
      %p100 = scmp.ne.s32.totalorder %s95, %s97
      %p101 = scmp.eq.s32.totalorder %s19, 0
      %p102 = por %p100, %p101
      %p103 = scmp.ne.s32.totalorder %s95, %s97
      %p104 = scmp.eq.s32.totalorder %s24, 1
      %p105 = por %p103, %p104
      %p106 = scmp.ne.s32.totalorder %s97, %s98
      %p107 = scmp.eq.s32.totalorder %s24, 0
      %p108 = por %p106, %p107
      %p109 = scmp.ne.s32.totalorder %s97, %s98
      %p110 = scmp.eq.s32.totalorder %s25, 1
      %p111 = por %p109, %p110
      %p113 = scmp.ne.s32.totalorder %s98, %s112
      %p114 = scmp.eq.s32.totalorder %s25, 0
      %p115 = por %p113, %p114
      %s117 = sadd.s32 %s116, 1
      %p120 = scmp.eq.s32.totalorder %s19, 1
      %p121 = scmp.ne.s32.totalorder %s116, %s118
      %p122 = scmp.eq.s32.totalorder %s19, 0
      %p123 = por %p121, %p122
      %p124 = scmp.ne.s32.totalorder %s116, %s118
      %p125 = scmp.eq.s32.totalorder %s24, 1
      %p126 = por %p124, %p125
      %p127 = scmp.ne.s32.totalorder %s118, %s119
      %p128 = scmp.eq.s32.totalorder %s24, 0
      %p129 = por %p127, %p128
      %p130 = scmp.ne.s32.totalorder %s118, %s119
      %p131 = scmp.eq.s32.totalorder %s25, 1
      %p132 = por %p130, %p131
      %p134 = scmp.ne.s32.totalorder %s119, %s133
      %p135 = scmp.eq.s32.totalorder %s25, 0
      %p136 = por %p134, %p135
      %s138 = sadd.s32 %s137, 1
      %p141 = scmp.eq.s32.totalorder %s19, 1
      %p142 = scmp.ne.s32.totalorder %s137, %s139
      %p143 = scmp.eq.s32.totalorder %s19, 0
      %p144 = por %p142, %p143
      %p145 = scmp.ne.s32.totalorder %s137, %s139
      %p146 = scmp.eq.s32.totalorder %s24, 1
      %p147 = por %p145, %p146
      %p148 = scmp.ne.s32.totalorder %s139, %s140
      %p149 = scmp.eq.s32.totalorder %s24, 0
      %p150 = por %p148, %p149
      %p151 = scmp.ne.s32.totalorder %s139, %s140
      %p152 = scmp.eq.s32.totalorder %s25, 1
      %p153 = por %p151, %p152
      %p155 = scmp.ne.s32.totalorder %s140, %s154
      %p156 = scmp.eq.s32.totalorder %s25, 0
      %p157 = por %p155, %p156
      %s158 = ssub.s32 %s19, %s26
      %p159 = scmp.eq.s32.totalorder %s158, 0
      %s161 = sadd.s32 %s160, 1
      %s162 = scalar_select %p159, %s160, %s161
      %p165 = pneg %p159
      %p166 = scmp.eq.s32.totalorder %s19, 1
      %p167 = por %p165, %p166
      %p168 = scmp.ne.s32.totalorder %s160, %s163
      %p169 = scmp.eq.s32.totalorder %s19, 0
      %p170 = por %p168, %p169
      %p171 = scmp.ne.s32.totalorder %s160, %s163
      %p172 = scmp.eq.s32.totalorder %s24, 1
      %p173 = por %p171, %p172
      %p174 = scmp.ne.s32.totalorder %s163, %s164
      %p175 = scmp.eq.s32.totalorder %s24, 0
      %p176 = por %p174, %p175
      %p177 = scmp.ne.s32.totalorder %s163, %s164
      %p178 = scmp.eq.s32.totalorder %s25, 1
      %p179 = por %p177, %p178
      %p181 = scmp.ne.s32.totalorder %s164, %s180
      %p182 = scmp.eq.s32.totalorder %s25, 0
      %p183 = por %p181, %p182
      %p184 = scmp.le.s32.totalorder 1, %s19
      %p185 = scmp.lt.s32.totalorder %s19, 3
      %p186 = pnand %p184, %p185
      %p187 = pneg %p186
      // Predicated region
      $region9: #{tpu_custom_call.1} parent=5 // pred_check
        _
      $region10: #{tpu_custom_call.1} parent=5 // pred_check_branch
        %189 = sbr.rel (%p186) target = $region12
      $region11: #{tpu_custom_call.1} parent=5 // pred_region
        %s190 = ssub.s32 %s19, 1
        // Predicated region
        $region13: #{tpu_custom_call.1} parent=11 // pred_check
          %p191 = pneg %p66
        $region14: #{tpu_custom_call.1} parent=11 // pred_check_branch
          %193 = sbr.rel (%p191) target = $region16
        $region15: #{tpu_custom_call.1} parent=11 // pred_region
          %s195 = ssub.s32 64, 64
          %196 = vsyncadd [#allocation7], %s195
          %s198 = sshll.u32 [#allocation6], 4
          %s199 = int_to_ptr.vmem [resolvable:$true] %s198
          %201 = dma.hbm_to_vmem [thread:$0]  %s1, 64, %s199, [#allocation7]
        $region16: #{tpu_custom_call.1} parent=11 // pred_fallthru
          _
        // Predicated region
        $region17: #{tpu_custom_call.1} parent=11 // pred_check
          %p202 = pneg %p87
        $region18: #{tpu_custom_call.1} parent=11 // pred_check_branch
          %204 = sbr.rel (%p202) target = $region20
        $region19: #{tpu_custom_call.1} parent=11 // pred_region
          %s206 = ssub.s32 64, 64
          %207 = vsyncadd [#allocation7], %s206
          %s209 = sshll.u32 [#allocation8], 4
          %s210 = int_to_ptr.vmem [resolvable:$true] %s209
          %212 = dma.hbm_to_vmem [thread:$0]  %s2, 64, %s210, [#allocation7]
        $region20: #{tpu_custom_call.1} parent=11 // pred_fallthru
          _
        // Predicated region
        $region21: #{tpu_custom_call.1} parent=11 // pred_check
          %p213 = pneg %p108
        $region22: #{tpu_custom_call.1} parent=11 // pred_check_branch
          %215 = sbr.rel (%p213) target = $region24
        $region23: #{tpu_custom_call.1} parent=11 // pred_region
          _
        $region24: #{tpu_custom_call.1} parent=11 // pred_fallthru
          _
        // Predicated region
        $region25: #{tpu_custom_call.1} parent=11 // pred_check
          %p216 = pneg %p129
        $region26: #{tpu_custom_call.1} parent=11 // pred_check_branch
          %218 = sbr.rel (%p216) target = $region28
        $region27: #{tpu_custom_call.1} parent=11 // pred_region
          _
        $region28: #{tpu_custom_call.1} parent=11 // pred_fallthru
          _
        // Predicated region
        $region29: #{tpu_custom_call.1} parent=11 // pred_check
          %p219 = pneg %p150
        $region30: #{tpu_custom_call.1} parent=11 // pred_check_branch
          %221 = sbr.rel (%p219) target = $region32
        $region31: #{tpu_custom_call.1} parent=11 // pred_region
          _
        $region32: #{tpu_custom_call.1} parent=11 // pred_fallthru
          _
      $region12: #{tpu_custom_call.1} parent=5 // pred_fallthru
        _
      %p222 = scmp.lt.s32.totalorder %s19, 2
      // Predicated region
      $region33: #{tpu_custom_call.1} parent=5 // pred_check
        %p223 = pneg %p222
      $region34: #{tpu_custom_call.1} parent=5 // pred_check_branch
        %225 = sbr.rel (%p223) target = $region36
      $region35: #{tpu_custom_call.1} parent=5 // pred_region
        // Predicated region
        $region37: #{tpu_custom_call.1} parent=35 // pred_check
          %p226 = pneg %p39
        $region38: #{tpu_custom_call.1} parent=35 // pred_check_branch
          %228 = sbr.rel (%p226) target = $region40
        $region39: #{tpu_custom_call.1} parent=35 // pred_region
          %s229 = sand.u32 %s29, 1
          %s230 = scalar_lea.sflag [#allocation4], %s229
          %s231 = sand.u32 %s29, 1
          %s232 = smul.addr %s231, 8
          %s233 = scalar_lea.vmem [#allocation3], %s232
          %s234 = smul.u32 2, %s19
          %s236 = ssub.s32 128, 128
          %237 = vsyncadd %s230, %s236
          %s238 = smul.addr %s234, 64
          %s239 = scalar_lea.hbm %s0, %s238
          %s241 = sshll.u32 %s233, 4
          %s242 = int_to_ptr.vmem [resolvable:$true] %s241
          %244 = dma.hbm_to_vmem [thread:$0]  %s239, 128, %s242, %s230
        $region40: #{tpu_custom_call.1} parent=35 // pred_fallthru
          _
      $region36: #{tpu_custom_call.1} parent=5 // pred_fallthru
        _
      %p245 = scmp.le.s32.totalorder 1, %s19
      %p246 = scmp.lt.s32.totalorder %s19, 3
      %p247 = pnand %p245, %p246
      %p248 = pneg %p247
      // Predicated region
      $region41: #{tpu_custom_call.1} parent=5 // pred_check
        _
      $region42: #{tpu_custom_call.1} parent=5 // pred_check_branch
        %250 = sbr.rel (%p247) target = $region44
      $region43: #{tpu_custom_call.1} parent=5 // pred_region
        %s251 = ssub.s32 %s19, 1
        %s252 = sand.u32 %s32, 1
        %s253 = scalar_lea.sflag [#allocation4], %s252
        %s254 = sand.u32 %s32, 1
        %s255 = smul.addr %s254, 8
        %s256 = scalar_lea.vmem [#allocation3], %s255
        // Predicated region
        $region45: #{tpu_custom_call.1} parent=43 // pred_check
          %p257 = pneg %p45
        $region46: #{tpu_custom_call.1} parent=43 // pred_check_branch
          %259 = sbr.rel (%p257) target = $region48
        $region47: #{tpu_custom_call.1} parent=43 // pred_region
          %260 = dma.done %s253, 128
        $region48: #{tpu_custom_call.1} parent=43 // pred_fallthru
          _
        // Predicated region
        $region49: #{tpu_custom_call.1} parent=43 // pred_check
          %p261 = pneg %p66
        $region50: #{tpu_custom_call.1} parent=43 // pred_check_branch
          %263 = sbr.rel (%p261) target = $region52
        $region51: #{tpu_custom_call.1} parent=43 // pred_region
          %264 = dma.done [#allocation7], 64
        $region52: #{tpu_custom_call.1} parent=43 // pred_fallthru
          _
        // Predicated region
        $region53: #{tpu_custom_call.1} parent=43 // pred_check
          %p265 = pneg %p87
        $region54: #{tpu_custom_call.1} parent=43 // pred_check_branch
          %267 = sbr.rel (%p265) target = $region56
        $region55: #{tpu_custom_call.1} parent=43 // pred_region
          %268 = dma.done [#allocation7], 64
        $region56: #{tpu_custom_call.1} parent=43 // pred_fallthru
          _
        %s269 = sand.u32 %s32, 1
        %s270 = scalar_lea.sflag [#allocation4], %s269
        %s271 = sand.u32 %s32, 1
        %s272 = smul.addr %s271, 8
        %s273 = scalar_lea.vmem [#allocation3], %s272
        %p274 = pneg %p45
        %p275 = pneg %p42
        %p276 = pneg %p66
        %p277 = pneg %p63
        %p278 = pneg %p87
        %p279 = pneg %p84
        %p280 = pneg %p108
        %p281 = pneg %p105
        %p282 = pneg %p129
        %p283 = pneg %p126
        %p284 = pneg %p150
        %p285 = pneg %p147
        %p286 = pneg %p176
        %p287 = pneg %p173
        %s288 = sand.u32 %s163, 1
        %s289 = scalar_lea.sflag [#allocation5], %s288
        %s290 = sand.u32 %s163, 1
        %s291 = smul.addr %s290, 8
        %s292 = scalar_lea.vmem [#allocation9], %s291
        %s293 = smul.u32 2, %s24
        %s294 = smul.u32 2, %s24
        %v296 = vld [vmem:[%s256] sm:$0xff]
        %v297 = vld [vmem:[%s5] sm:$0xff]
        %v298 = vld [vmem:[%s5 + $0x8] sm:$0x11]
        %299 = vst [vmem:[#allocation2] sm:$0xcc] 0
        %300 = vst [vmem:[#allocation2 + $0x8] sm:$0xff] 0
        %301 = vst [vmem:[#allocation2 + $0x10] sm:$0xcc] 0
        %302 = vst [vmem:[#allocation2 + $0x18] sm:$0xff] 0
        %303 = vst [vmem:[#allocation2 + $0x20] sm:$0xcc] 0
        %304 = vst [vmem:[#allocation2 + $0x28] sm:$0xff] 0
        %305 = vst [vmem:[#allocation2 + $0x30] sm:$0xcc] 0
        %306 = vst [vmem:[#allocation2 + $0x38] sm:$0xff] 0
        %307 = vst [vmem:[#allocation2 + $0x40] sm:$0xcc] 0
        %308 = vst [vmem:[#allocation2 + $0x48] sm:$0xff] 0
        %309 = vst [vmem:[#allocation2 + $0x50] sm:$0xcc] 0
        %310 = vst [vmem:[#allocation2 + $0x58] sm:$0xff] 0
        %311 = vst [vmem:[#allocation2 + $0x60] sm:$0xcc] 0
        %312 = vst [vmem:[#allocation2 + $0x68] sm:$0xff] 0
        %313 = vst [vmem:[#allocation2 + $0x70] sm:$0xcc] 0
        %314 = vst [vmem:[#allocation2 + $0x78] sm:$0xff] 0
        %315 = vst [vmem:[#allocation2 + $0x80] sm:$0xcc] 0
        %316 = vst [vmem:[#allocation2 + $0x88] sm:$0xff] 0
        %v318 = vcombine.high %v296, %v296
        %320 = vrot.lane.b32.xlu0 %v296, 17
        %v321 = vpop.permute.xlu0 %320
        %322 = vrot.lane.b32.xlu0 %v318, 17
        %v323 = vpop.permute.xlu0 %322
        %v324 = vlaneseq
        %v325 = vand.u32 %v324, 127
        %vm326 = vcmp.lt.s32.totalorder %v325, 17
        %v327 = vsel %vm326, %v321, %v323
        %v328 = vsel %vm326, %v323, %v321
        %v329 = vpack.c.bf16 %v328, %v328
        %v330 = vpack.c.bf16 %v327, %v327
        %v332 = vunpack.c.l.b16 %v297
        %v333 = vunpack.c.h.b16 %v297
        %v334 = vpack.c.b16 %v332, %v332
        %v335 = vpack.c.b16 %v333, %v333
        %v337 = vpack.i.b16 %v334, %v334
        %v339 = vlaneseq
        %v340 = vshrl.u32 %v339, 7
        %v341 = vsub.s32 0, %v340
        %v342 = vrot.slane %v337, %v341
        %v344 = vpack.i.b16 %v335, %v335
        %v346 = vlaneseq
        %v347 = vshrl.u32 %v346, 7
        %v348 = vsub.s32 0, %v347
        %v349 = vrot.slane %v344, %v348
        %v350 = vmul.bf16 %v329, %v342
        %v351 = vmul.bf16 %v330, %v349
        %v354 = vunpack.c.l.b16 %v350
        %v355 = vunpack.c.l.b16 %v351
        %v356 = vpack.c.b16 %v355, %v354
        %358 = vst [vmem:[#allocation2] sm:$0x33] %v356
        %359 = vrot.lane.b32.xlu0 %v296, 16
        %v360 = vpop.permute.xlu0 %359
        %361 = vrot.lane.b32.xlu0 %v318, 16
        %v362 = vpop.permute.xlu0 %361
        %vm363 = vcmp.lt.s32.totalorder %v325, 16
        %v364 = vsel %vm363, %v360, %v362
        %v365 = vsel %vm363, %v362, %v360
        %v366 = vpack.c.bf16 %v365, %v365
        %v367 = vpack.c.bf16 %v364, %v364
        %v368 = vshrl.u32 %v334, 16
        %v369 = vpack.i.b16 %v368, %v368
        %v371 = vlaneseq
        %v372 = vshrl.u32 %v371, 7
        %v373 = vsub.s32 0, %v372
        %v374 = vrot.slane %v369, %v373
        %v375 = vshrl.u32 %v335, 16
        %v376 = vpack.i.b16 %v375, %v375
        %v378 = vlaneseq
        %v379 = vshrl.u32 %v378, 7
        %v380 = vsub.s32 0, %v379
        %v381 = vrot.slane %v376, %v380
        %v382 = vmul.bf16 %v366, %v374
        %v383 = vmul.bf16 %v367, %v381
        %v386 = vunpack.c.l.b16 %v382
        %v387 = vunpack.c.l.b16 %v383
        %v388 = vpack.c.b16 %v387, %v386
        %390 = vst [vmem:[#allocation2 + $0x10] sm:$0x33] %v388
        %391 = vrot.lane.b32.xlu0 %v296, 15
        %v392 = vpop.permute.xlu0 %391
        %393 = vrot.lane.b32.xlu0 %v318, 15
        %v394 = vpop.permute.xlu0 %393
        %vm395 = vcmp.lt.s32.totalorder %v325, 15
        %v396 = vsel %vm395, %v392, %v394
        %v397 = vsel %vm395, %v394, %v392
        %v398 = vpack.c.bf16 %v397, %v397
        %v399 = vpack.c.bf16 %v396, %v396
        %v400 = vlaneseq
        %v401 = vshrl.u32 %v400, 7
        %v402 = vsub.s32 1, %v401
        %v403 = vrot.slane %v337, %v402
        %v404 = vlaneseq
        %v405 = vshrl.u32 %v404, 7
        %v406 = vsub.s32 1, %v405
        %v407 = vrot.slane %v344, %v406
        %v408 = vmul.bf16 %v398, %v403
        %v409 = vmul.bf16 %v399, %v407
        %v412 = vunpack.c.l.b16 %v408
        %v413 = vunpack.c.l.b16 %v409
        %v414 = vpack.c.b16 %v413, %v412
        %416 = vst [vmem:[#allocation2 + $0x20] sm:$0x33] %v414
        %417 = vrot.lane.b32.xlu0 %v296, 1
        %v418 = vpop.permute.xlu0 %417
        %419 = vrot.lane.b32.xlu0 %v318, 1
        %v420 = vpop.permute.xlu0 %419
        %vm421 = vcmp.lt.s32.totalorder %v325, 1
        %v422 = vsel %vm421, %v418, %v420
        %v423 = vsel %vm421, %v420, %v418
        %v424 = vpack.c.bf16 %v423, %v423
        %v425 = vpack.c.bf16 %v422, %v422
        %v426 = vlaneseq
        %v427 = vshrl.u32 %v426, 7
        %v428 = vsub.s32 1, %v427
        %v429 = vrot.slane %v369, %v428
        %v430 = vlaneseq
        %v431 = vshrl.u32 %v430, 7
        %v432 = vsub.s32 1, %v431
        %v433 = vrot.slane %v376, %v432
        %v434 = vmul.bf16 %v424, %v429
        %v435 = vmul.bf16 %v425, %v433
        %v438 = vunpack.c.l.b16 %v434
        %v439 = vunpack.c.l.b16 %v435
        %v440 = vpack.c.b16 %v439, %v438
        %442 = vst [vmem:[#allocation2 + $0x30] sm:$0x33] %v440
        %v443 = vpack.c.bf16 %v296, %v296
        %v444 = vpack.c.bf16 %v318, %v318
        %v447 = vunpack.c.l.b16 %v443
        %v448 = vunpack.c.l.b16 %v444
        %v449 = vpack.c.b16 %v448, %v447
        %451 = vst [vmem:[#allocation2 + $0x40] sm:$0x33] %v449
        %452 = vrot.lane.b32.xlu0 %v296, 127
        %v453 = vpop.permute.xlu0 %452
        %454 = vrot.lane.b32.xlu0 %v318, 127
        %v455 = vpop.permute.xlu0 %454
        %vm456 = vcmp.lt.s32.totalorder %v325, 127
        %v457 = vsel %vm456, %v453, %v455
        %v458 = vsel %vm456, %v455, %v453
        %v459 = vpack.c.bf16 %v457, %v457
        %v460 = vpack.c.bf16 %v458, %v458
        %v461 = vlaneseq
        %v462 = vshrl.u32 %v461, 7
        %v463 = vsub.s32 2, %v462
        %v464 = vrot.slane %v369, %v463
        %v465 = vlaneseq
        %v466 = vshrl.u32 %v465, 7
        %v467 = vsub.s32 2, %v466
        %v468 = vrot.slane %v376, %v467
        %v469 = vmul.bf16 %v459, %v464
        %v470 = vmul.bf16 %v460, %v468
        %v473 = vunpack.c.l.b16 %v469
        %v474 = vunpack.c.l.b16 %v470
        %v475 = vpack.c.b16 %v474, %v473
        %477 = vst [vmem:[#allocation2 + $0x50] sm:$0x33] %v475
        %478 = vrot.lane.b32.xlu0 %v296, 113
        %v479 = vpop.permute.xlu0 %478
        %480 = vrot.lane.b32.xlu0 %v318, 113
        %v481 = vpop.permute.xlu0 %480
        %vm482 = vcmp.lt.s32.totalorder %v325, 113
        %v483 = vsel %vm482, %v479, %v481
        %v484 = vsel %vm482, %v481, %v479
        %v485 = vpack.c.bf16 %v483, %v483
        %v486 = vpack.c.bf16 %v484, %v484
        %v487 = vlaneseq
        %v488 = vshrl.u32 %v487, 7
        %v489 = vsub.s32 3, %v488
        %v490 = vrot.slane %v337, %v489
        %v491 = vlaneseq
        %v492 = vshrl.u32 %v491, 7
        %v493 = vsub.s32 3, %v492
        %v494 = vrot.slane %v344, %v493
        %v495 = vmul.bf16 %v485, %v490
        %v496 = vmul.bf16 %v486, %v494
        %v499 = vunpack.c.l.b16 %v495
        %v500 = vunpack.c.l.b16 %v496
        %v501 = vpack.c.b16 %v500, %v499
        %503 = vst [vmem:[#allocation2 + $0x60] sm:$0x33] %v501
        %504 = vrot.lane.b32.xlu0 %v296, 112
        %v505 = vpop.permute.xlu0 %504
        %506 = vrot.lane.b32.xlu0 %v318, 112
        %v507 = vpop.permute.xlu0 %506
        %vm508 = vcmp.lt.s32.totalorder %v325, 112
        %v509 = vsel %vm508, %v505, %v507
        %v510 = vsel %vm508, %v507, %v505
        %v511 = vpack.c.bf16 %v509, %v509
        %v512 = vpack.c.bf16 %v510, %v510
        %v513 = vlaneseq
        %v514 = vshrl.u32 %v513, 7
        %v515 = vsub.s32 3, %v514
        %v516 = vrot.slane %v369, %v515
        %v517 = vlaneseq
        %v518 = vshrl.u32 %v517, 7
        %v519 = vsub.s32 3, %v518
        %v520 = vrot.slane %v376, %v519
        %v521 = vmul.bf16 %v511, %v516
        %v522 = vmul.bf16 %v512, %v520
        %v525 = vunpack.c.l.b16 %v521
        %v526 = vunpack.c.l.b16 %v522
        %v527 = vpack.c.b16 %v526, %v525
        %529 = vst [vmem:[#allocation2 + $0x70] sm:$0x33] %v527
        %530 = vrot.lane.b32.xlu0 %v296, 111
        %v531 = vpop.permute.xlu0 %530
        %532 = vrot.lane.b32.xlu0 %v318, 111
        %v533 = vpop.permute.xlu0 %532
        %vm534 = vcmp.lt.s32.totalorder %v325, 111
        %v535 = vsel %vm534, %v531, %v533
        %v536 = vsel %vm534, %v533, %v531
        %v537 = vpack.c.bf16 %v535, %v535
        %v538 = vpack.c.bf16 %v536, %v536
        %v540 = vunpack.c.l.b16 %v298
        %v541 = vunpack.c.h.b16 %v298
        %v542 = vpack.c.b16 %v540, %v540
        %v543 = vpack.c.b16 %v541, %v541
        %v545 = vpack.i.b16 %v542, %v542
        %v547 = vlaneseq
        %v548 = vshrl.u32 %v547, 7
        %v549 = vsub.s32 0, %v548
        %v550 = vrot.slane %v545, %v549
        %v552 = vpack.i.b16 %v543, %v543
        %v554 = vlaneseq
        %v555 = vshrl.u32 %v554, 7
        %v556 = vsub.s32 0, %v555
        %v557 = vrot.slane %v552, %v556
        %v558 = vmul.bf16 %v537, %v550
        %v559 = vmul.bf16 %v538, %v557
        %v562 = vunpack.c.l.b16 %v558
        %v563 = vunpack.c.l.b16 %v559
        %v564 = vpack.c.b16 %v563, %v562
        %566 = vst [vmem:[#allocation2 + $0x80] sm:$0x33] %v564
        %v567 = vld [vmem:[#allocation6] sm:$0xf]
        %v568 = vld [vmem:[#allocation2] sm:$0xff]
        %v569 = vld [vmem:[#allocation2 + $0x8] sm:$0xff]
        %v570 = vld [vmem:[#allocation2 + $0x10] sm:$0xff]
        %v571 = vld [vmem:[#allocation2 + $0x18] sm:$0xff]
        %v572 = vld [vmem:[#allocation2 + $0x20] sm:$0xff]
        %v573 = vld [vmem:[#allocation2 + $0x28] sm:$0xff]
        %v574 = vld [vmem:[#allocation2 + $0x30] sm:$0xff]
        %v575 = vld [vmem:[#allocation2 + $0x38] sm:$0xff]
        %v576 = vld [vmem:[#allocation2 + $0x40] sm:$0xff]
        %v577 = vld [vmem:[#allocation2 + $0x48] sm:$0xff]
        %v578 = vld [vmem:[#allocation2 + $0x50] sm:$0xff]
        %v579 = vld [vmem:[#allocation2 + $0x58] sm:$0xff]
        %v580 = vld [vmem:[#allocation2 + $0x60] sm:$0xff]
        %v581 = vld [vmem:[#allocation2 + $0x68] sm:$0xff]
        %v582 = vld [vmem:[#allocation2 + $0x70] sm:$0xff]
        %v583 = vld [vmem:[#allocation2 + $0x78] sm:$0xff]
        %v584 = vld [vmem:[#allocation2 + $0x80] sm:$0xff]
        %v585 = vld [vmem:[#allocation2 + $0x88] sm:$0xff]
        %v586 = vld [vmem:[%s3] sm:$0xf]
        %588 = vset.pattern.permute.xlu0 0
        %589 = vperm.xlu0 %588, %v586
        %v590 = vpop.permute.xlu0 %589
        %v594 = vunpack.c.l.s4 1983009808
        %v595 = vunpack.c.0.s8 %v594
        %v596 = vlaneseq
        %v597 = vshrl.u32 %v596, 7
        %v598 = vsub.s32 %v595, %v597
        %v599 = vrot.slane %v567, %v598
        %v600 = vcombine.high %v599, %v599
        %v620 = vunpack.c.l.b16 %v568
        %v621 = vunpack.c.h.b16 %v568
        %v622 = vunpack.c.l.b16 %v569
        %v623 = vunpack.c.h.b16 %v569
        %v624 = vunpack.c.l.b16 %v570
        %v625 = vunpack.c.h.b16 %v570
        %v626 = vunpack.c.l.b16 %v571
        %v627 = vunpack.c.h.b16 %v571
        %v628 = vunpack.c.l.b16 %v572
        %v629 = vunpack.c.h.b16 %v572
        %v630 = vunpack.c.l.b16 %v573
        %v631 = vunpack.c.h.b16 %v573
        %v632 = vunpack.c.l.b16 %v574
        %v633 = vunpack.c.h.b16 %v574
        %v634 = vunpack.c.l.b16 %v575
        %v635 = vunpack.c.h.b16 %v575
        %v636 = vunpack.c.l.b16 %v576
        %v637 = vunpack.c.h.b16 %v576
        %v638 = vunpack.c.l.b16 %v577
        %v639 = vunpack.c.h.b16 %v577
        %v640 = vunpack.c.l.b16 %v578
        %v641 = vunpack.c.h.b16 %v578
        %v642 = vunpack.c.l.b16 %v579
        %v643 = vunpack.c.h.b16 %v579
        %v644 = vunpack.c.l.b16 %v580
        %v645 = vunpack.c.h.b16 %v580
        %v646 = vunpack.c.l.b16 %v581
        %v647 = vunpack.c.h.b16 %v581
        %v648 = vunpack.c.l.b16 %v582
        %v649 = vunpack.c.h.b16 %v582
        %v650 = vunpack.c.l.b16 %v583
        %v651 = vunpack.c.h.b16 %v583
        %v652 = vunpack.c.l.b16 %v584
        %v653 = vunpack.c.h.b16 %v584
        %v654 = vunpack.c.l.b16 %v585
        %v655 = vunpack.c.h.b16 %v585
        %v656 = vpack.c.b16 %v622, %v620
        %v657 = vpack.c.b16 %v623, %v621
        %v658 = vpack.c.b16 %v626, %v624
        %v659 = vpack.c.b16 %v627, %v625
        %v660 = vpack.c.b16 %v630, %v628
        %v661 = vpack.c.b16 %v631, %v629
        %v662 = vpack.c.b16 %v634, %v632
        %v663 = vpack.c.b16 %v635, %v633
        %v664 = vpack.c.b16 %v638, %v636
        %v665 = vpack.c.b16 %v639, %v637
        %v666 = vpack.c.b16 %v642, %v640
        %v667 = vpack.c.b16 %v643, %v641
        %v668 = vpack.c.b16 %v646, %v644
        %v669 = vpack.c.b16 %v647, %v645
        %v670 = vpack.c.b16 %v650, %v648
        %v671 = vpack.c.b16 %v651, %v649
        %v672 = vpack.c.b16 %v654, %v652
        %v673 = vpack.c.b16 %v655, %v653
        %vm692 = vcmask 130048
        %v694 = vsel %vm692, %v600, 0
        %696 = vmatprep.subr.bf16.mxu0 %v671
        %697 = vmatpush1.bf16.msra.mxu0 %v670
        %698 = vmatprep.subr.bf16.mxu0 %v669
        %699 = vmatpush1.bf16.msra.mxu0 %v668
        %700 = vmatprep.subr.bf16.mxu0 %v667
        %701 = vmatpush1.bf16.msra.mxu0 %v666
        %702 = vmatprep.subr.bf16.mxu0 %v665
        %703 = vmatpush1.bf16.msra.mxu0 %v664
        %704 = vmatprep.subr.bf16.mxu0 %v663
        %705 = vmatpush1.bf16.msra.mxu0 %v662
        %706 = vmatprep.subr.bf16.mxu0 %v661
        %707 = vmatpush1.bf16.msra.mxu0 %v660
        %708 = vmatprep.subr.bf16.mxu0 %v659
        %709 = vmatpush1.bf16.msra.mxu0 %v658
        %710 = vmatprep.subr.bf16.mxu0 %v657
        %711 = vmatpush1.bf16.msra.mxu0 %v656
        %712 = vmatprep.subr.bf16.mxu0 0
        %713 = vmatpush2.bf16.msra.mxu0 0
        %714 = vmatprep.subr.bf16.mxu0 0
        %715 = vmatpush2.bf16.msra.mxu0 0
        %716 = vmatprep.subr.bf16.mxu0 0
        %717 = vmatpush2.bf16.msra.mxu0 0
        %718 = vmatprep.subr.bf16.mxu0 0
        %719 = vmatpush2.bf16.msra.mxu0 0
        %720 = vmatprep.subr.bf16.mxu0 0
        %721 = vmatpush2.bf16.msra.mxu0 0
        %722 = vmatprep.subr.bf16.mxu0 0
        %723 = vmatpush2.bf16.msra.mxu0 0
        %724 = vmatprep.subr.bf16.mxu0 0
        %725 = vmatpush2.bf16.msra.mxu0 0
        %726 = vmatprep.subr.bf16.mxu0 %v673
        %727 = vmatpush2.bf16.msra.mxu0 %v672
        %728 = vmatprep.mubr.bf16.mxu0 %v694
        %729 = vmatmul.mubr.bf16.gmra.mxu0 %v599
        %v730 = vpop.f32.mrf.mxu0
        %v731 = vadd.f32 %v590, %v730
        %v732 = vpop.f32.mrf.mxu0
        %v733 = vadd.f32 %v590, %v732
        %v734 = vpop.f32.mrf.mxu0
        %v735 = vpop.f32.mrf.mxu0
        %736 = vdwg.mxu0
        %v737 = vmax.f32 %v731, 0.0
        %v738 = vmax.f32 %v733, 0.0
        %739 = vrot.lane.b32.xlu0 %v737, 17
        %v740 = vpop.permute.xlu0 %739
        %741 = vrot.lane.b32.xlu0 %v738, 17
        %v742 = vpop.permute.xlu0 %741
        %v743 = vsel %vm326, %v740, %v742
        %v744 = vsel %vm326, %v742, %v740
        %v745 = vpack.c.bf16 %v744, %v744
        %v746 = vpack.c.bf16 %v743, %v743
        %v747 = vmul.bf16 %v745, %v342
        %v748 = vmul.bf16 %v746, %v349
        %v751 = vunpack.c.l.b16 %v747
        %v752 = vunpack.c.l.b16 %v748
        %v753 = vpack.c.b16 %v752, %v751
        %755 = vst [vmem:[#allocation2] sm:$0x33] %v753
        %756 = vrot.lane.b32.xlu0 %v737, 16
        %v757 = vpop.permute.xlu0 %756
        %758 = vrot.lane.b32.xlu0 %v738, 16
        %v759 = vpop.permute.xlu0 %758
        %v760 = vsel %vm363, %v757, %v759
        %v761 = vsel %vm363, %v759, %v757
        %v762 = vpack.c.bf16 %v761, %v761
        %v763 = vpack.c.bf16 %v760, %v760
        %v764 = vmul.bf16 %v762, %v374
        %v765 = vmul.bf16 %v763, %v381
        %v768 = vunpack.c.l.b16 %v764
        %v769 = vunpack.c.l.b16 %v765
        %v770 = vpack.c.b16 %v769, %v768
        %772 = vst [vmem:[#allocation2 + $0x10] sm:$0x33] %v770
        %773 = vrot.lane.b32.xlu0 %v737, 15
        %v774 = vpop.permute.xlu0 %773
        %775 = vrot.lane.b32.xlu0 %v738, 15
        %v776 = vpop.permute.xlu0 %775
        %v777 = vsel %vm395, %v774, %v776
        %v778 = vsel %vm395, %v776, %v774
        %v779 = vpack.c.bf16 %v778, %v778
        %v780 = vpack.c.bf16 %v777, %v777
        %v781 = vmul.bf16 %v779, %v403
        %v782 = vmul.bf16 %v780, %v407
        %v785 = vunpack.c.l.b16 %v781
        %v786 = vunpack.c.l.b16 %v782
        %v787 = vpack.c.b16 %v786, %v785
        %789 = vst [vmem:[#allocation2 + $0x20] sm:$0x33] %v787
        %790 = vrot.lane.b32.xlu0 %v737, 1
        %v791 = vpop.permute.xlu0 %790
        %792 = vrot.lane.b32.xlu0 %v738, 1
        %v793 = vpop.permute.xlu0 %792
        %v794 = vsel %vm421, %v791, %v793
        %v795 = vsel %vm421, %v793, %v791
        %v796 = vpack.c.bf16 %v795, %v795
        %v797 = vpack.c.bf16 %v794, %v794
        %v798 = vmul.bf16 %v796, %v429
        %v799 = vmul.bf16 %v797, %v433
        %v802 = vunpack.c.l.b16 %v798
        %v803 = vunpack.c.l.b16 %v799
        %v804 = vpack.c.b16 %v803, %v802
        %806 = vst [vmem:[#allocation2 + $0x30] sm:$0x33] %v804
        %v807 = vpack.c.bf16 %v737, %v737
        %v808 = vpack.c.bf16 %v738, %v738
        %v811 = vunpack.c.l.b16 %v807
        %v812 = vunpack.c.l.b16 %v808
        %v813 = vpack.c.b16 %v812, %v811
        %815 = vst [vmem:[#allocation2 + $0x40] sm:$0x33] %v813
        %816 = vrot.lane.b32.xlu0 %v737, 127
        %v817 = vpop.permute.xlu0 %816
        %818 = vrot.lane.b32.xlu0 %v738, 127
        %v819 = vpop.permute.xlu0 %818
        %v820 = vsel %vm456, %v817, %v819
        %v821 = vsel %vm456, %v819, %v817
        %v822 = vpack.c.bf16 %v820, %v820
        %v823 = vpack.c.bf16 %v821, %v821
        %v824 = vmul.bf16 %v822, %v464
        %v825 = vmul.bf16 %v823, %v468
        %v828 = vunpack.c.l.b16 %v824
        %v829 = vunpack.c.l.b16 %v825
        %v830 = vpack.c.b16 %v829, %v828
        %832 = vst [vmem:[#allocation2 + $0x50] sm:$0x33] %v830
        %833 = vrot.lane.b32.xlu0 %v737, 113
        %v834 = vpop.permute.xlu0 %833
        %835 = vrot.lane.b32.xlu0 %v738, 113
        %v836 = vpop.permute.xlu0 %835
        %v837 = vsel %vm482, %v834, %v836
        %v838 = vsel %vm482, %v836, %v834
        %v839 = vpack.c.bf16 %v837, %v837
        %v840 = vpack.c.bf16 %v838, %v838
        %v841 = vmul.bf16 %v839, %v490
        %v842 = vmul.bf16 %v840, %v494
        %v845 = vunpack.c.l.b16 %v841
        %v846 = vunpack.c.l.b16 %v842
        %v847 = vpack.c.b16 %v846, %v845
        %849 = vst [vmem:[#allocation2 + $0x60] sm:$0x33] %v847
        %850 = vrot.lane.b32.xlu0 %v737, 112
        %v851 = vpop.permute.xlu0 %850
        %852 = vrot.lane.b32.xlu0 %v738, 112
        %v853 = vpop.permute.xlu0 %852
        %v854 = vsel %vm508, %v851, %v853
        %v855 = vsel %vm508, %v853, %v851
        %v856 = vpack.c.bf16 %v854, %v854
        %v857 = vpack.c.bf16 %v855, %v855
        %v858 = vmul.bf16 %v856, %v516
        %v859 = vmul.bf16 %v857, %v520
        %v862 = vunpack.c.l.b16 %v858
        %v863 = vunpack.c.l.b16 %v859
        %v864 = vpack.c.b16 %v863, %v862
        %866 = vst [vmem:[#allocation2 + $0x70] sm:$0x33] %v864
        %867 = vrot.lane.b32.xlu0 %v737, 111
        %v868 = vpop.permute.xlu0 %867
        %869 = vrot.lane.b32.xlu0 %v738, 111
        %v870 = vpop.permute.xlu0 %869
        %v871 = vsel %vm534, %v868, %v870
        %v872 = vsel %vm534, %v870, %v868
        %v873 = vpack.c.bf16 %v871, %v871
        %v874 = vpack.c.bf16 %v872, %v872
        %v875 = vmul.bf16 %v873, %v550
        %v876 = vmul.bf16 %v874, %v557
        %v879 = vunpack.c.l.b16 %v875
        %v880 = vunpack.c.l.b16 %v876
        %v881 = vpack.c.b16 %v880, %v879
        %883 = vst [vmem:[#allocation2 + $0x80] sm:$0x33] %v881
        %v884 = vld [vmem:[#allocation8] sm:$0xf]
        %v885 = vld [vmem:[#allocation2] sm:$0xff]
        %v886 = vld [vmem:[#allocation2 + $0x8] sm:$0xff]
        %v887 = vld [vmem:[#allocation2 + $0x10] sm:$0xff]
        %v888 = vld [vmem:[#allocation2 + $0x18] sm:$0xff]
        %v889 = vld [vmem:[#allocation2 + $0x20] sm:$0xff]
        %v890 = vld [vmem:[#allocation2 + $0x28] sm:$0xff]
        %v891 = vld [vmem:[#allocation2 + $0x30] sm:$0xff]
        %v892 = vld [vmem:[#allocation2 + $0x38] sm:$0xff]
        %v893 = vld [vmem:[#allocation2 + $0x40] sm:$0xff]
        %v894 = vld [vmem:[#allocation2 + $0x48] sm:$0xff]
        %v895 = vld [vmem:[#allocation2 + $0x50] sm:$0xff]
        %v896 = vld [vmem:[#allocation2 + $0x58] sm:$0xff]
        %v897 = vld [vmem:[#allocation2 + $0x60] sm:$0xff]
        %v898 = vld [vmem:[#allocation2 + $0x68] sm:$0xff]
        %v899 = vld [vmem:[#allocation2 + $0x70] sm:$0xff]
        %v900 = vld [vmem:[#allocation2 + $0x78] sm:$0xff]
        %v901 = vld [vmem:[#allocation2 + $0x80] sm:$0xff]
        %v902 = vld [vmem:[#allocation2 + $0x88] sm:$0xff]
        %v903 = vld [vmem:[%s4] sm:$0xf]
        %905 = vset.pattern.permute.xlu0 0
        %906 = vperm.xlu0 %905, %v903
        %v907 = vpop.permute.xlu0 %906
        %v911 = vunpack.c.l.s4 1983009808
        %v912 = vunpack.c.0.s8 %v911
        %v913 = vlaneseq
        %v914 = vshrl.u32 %v913, 7
        %v915 = vsub.s32 %v912, %v914
        %v916 = vrot.slane %v884, %v915
        %v917 = vcombine.high %v916, %v916
        %v937 = vunpack.c.l.b16 %v885
        %v938 = vunpack.c.h.b16 %v885
        %v939 = vunpack.c.l.b16 %v886
        %v940 = vunpack.c.h.b16 %v886
        %v941 = vunpack.c.l.b16 %v887
        %v942 = vunpack.c.h.b16 %v887
        %v943 = vunpack.c.l.b16 %v888
        %v944 = vunpack.c.h.b16 %v888
        %v945 = vunpack.c.l.b16 %v889
        %v946 = vunpack.c.h.b16 %v889
        %v947 = vunpack.c.l.b16 %v890
        %v948 = vunpack.c.h.b16 %v890
        %v949 = vunpack.c.l.b16 %v891
        %v950 = vunpack.c.h.b16 %v891
        %v951 = vunpack.c.l.b16 %v892
        %v952 = vunpack.c.h.b16 %v892
        %v953 = vunpack.c.l.b16 %v893
        %v954 = vunpack.c.h.b16 %v893
        %v955 = vunpack.c.l.b16 %v894
        %v956 = vunpack.c.h.b16 %v894
        %v957 = vunpack.c.l.b16 %v895
        %v958 = vunpack.c.h.b16 %v895
        %v959 = vunpack.c.l.b16 %v896
        %v960 = vunpack.c.h.b16 %v896
        %v961 = vunpack.c.l.b16 %v897
        %v962 = vunpack.c.h.b16 %v897
        %v963 = vunpack.c.l.b16 %v898
        %v964 = vunpack.c.h.b16 %v898
        %v965 = vunpack.c.l.b16 %v899
        %v966 = vunpack.c.h.b16 %v899
        %v967 = vunpack.c.l.b16 %v900
        %v968 = vunpack.c.h.b16 %v900
        %v969 = vunpack.c.l.b16 %v901
        %v970 = vunpack.c.h.b16 %v901
        %v971 = vunpack.c.l.b16 %v902
        %v972 = vunpack.c.h.b16 %v902
        %v973 = vpack.c.b16 %v939, %v937
        %v974 = vpack.c.b16 %v940, %v938
        %v975 = vpack.c.b16 %v943, %v941
        %v976 = vpack.c.b16 %v944, %v942
        %v977 = vpack.c.b16 %v947, %v945
        %v978 = vpack.c.b16 %v948, %v946
        %v979 = vpack.c.b16 %v951, %v949
        %v980 = vpack.c.b16 %v952, %v950
        %v981 = vpack.c.b16 %v955, %v953
        %v982 = vpack.c.b16 %v956, %v954
        %v983 = vpack.c.b16 %v959, %v957
        %v984 = vpack.c.b16 %v960, %v958
        %v985 = vpack.c.b16 %v963, %v961
        %v986 = vpack.c.b16 %v964, %v962
        %v987 = vpack.c.b16 %v967, %v965
        %v988 = vpack.c.b16 %v968, %v966
        %v989 = vpack.c.b16 %v971, %v969
        %v990 = vpack.c.b16 %v972, %v970
        %v1010 = vsel %vm692, %v917, 0
        %1012 = vmatprep.subr.bf16.mxu0 %v988
        %1013 = vmatpush1.bf16.msra.mxu0 %v987
        %1014 = vmatprep.subr.bf16.mxu0 %v986
        %1015 = vmatpush1.bf16.msra.mxu0 %v985
        %1016 = vmatprep.subr.bf16.mxu0 %v984
        %1017 = vmatpush1.bf16.msra.mxu0 %v983
        %1018 = vmatprep.subr.bf16.mxu0 %v982
        %1019 = vmatpush1.bf16.msra.mxu0 %v981
        %1020 = vmatprep.subr.bf16.mxu0 %v980
        %1021 = vmatpush1.bf16.msra.mxu0 %v979
        %1022 = vmatprep.subr.bf16.mxu0 %v978
        %1023 = vmatpush1.bf16.msra.mxu0 %v977
        %1024 = vmatprep.subr.bf16.mxu0 %v976
        %1025 = vmatpush1.bf16.msra.mxu0 %v975
        %1026 = vmatprep.subr.bf16.mxu0 %v974
        %1027 = vmatpush1.bf16.msra.mxu0 %v973
        %1028 = vmatprep.subr.bf16.mxu0 0
        %1029 = vmatpush2.bf16.msra.mxu0 0
        %1030 = vmatprep.subr.bf16.mxu0 0
        %1031 = vmatpush2.bf16.msra.mxu0 0
        %1032 = vmatprep.subr.bf16.mxu0 0
        %1033 = vmatpush2.bf16.msra.mxu0 0
        %1034 = vmatprep.subr.bf16.mxu0 0
        %1035 = vmatpush2.bf16.msra.mxu0 0
        %1036 = vmatprep.subr.bf16.mxu0 0
        %1037 = vmatpush2.bf16.msra.mxu0 0
        %1038 = vmatprep.subr.bf16.mxu0 0
        %1039 = vmatpush2.bf16.msra.mxu0 0
        %1040 = vmatprep.subr.bf16.mxu0 0
        %1041 = vmatpush2.bf16.msra.mxu0 0
        %1042 = vmatprep.subr.bf16.mxu0 %v990
        %1043 = vmatpush2.bf16.msra.mxu0 %v989
        %1044 = vmatprep.mubr.bf16.mxu0 %v1010
        %1045 = vmatmul.mubr.bf16.gmra.mxu0 %v916
        %v1046 = vpop.f32.mrf.mxu0
        %v1047 = vadd.f32 %v907, %v1046
        %v1048 = vpop.f32.mrf.mxu0
        %v1049 = vadd.f32 %v907, %v1048
        %v1050 = vpop.f32.mrf.mxu0
        %v1051 = vpop.f32.mrf.mxu0
        %1052 = vdwg.mxu0
        %v1053 = vadd.f32 %v1047, %v296
        %v1054 = vadd.f32 %v1049, %v318
        %v1055 = vmax.f32 %v1053, 0.0
        %v1056 = vmax.f32 %v1054, 0.0
        %v1059 = vcombine.low %v1055, %v1056
        %1061 = vst [vmem:[%s292] sm:$0xff] %v1059
        %s1062 = sand.u32 %s163, 1
        %s1063 = scalar_lea.sflag [#allocation5], %s1062
        %s1064 = sand.u32 %s163, 1
        %s1065 = smul.addr %s1064, 8
        %s1066 = scalar_lea.vmem [#allocation9], %s1065
        // Predicated region
        $region57: #{tpu_custom_call.1} parent=43 // pred_check
          %p1067 = pneg %p173
        $region58: #{tpu_custom_call.1} parent=43 // pred_check_branch
          %1069 = sbr.rel (%p1067) target = $region60
        $region59: #{tpu_custom_call.1} parent=43 // pred_region
          %s1070 = smul.u32 2, %s24
          %s1072 = ssub.s32 128, 128
          %1073 = vsyncadd %s1063, %s1072
          %s1074 = smul.addr %s1070, 64
          %s1075 = scalar_lea.hbm %s6, %s1074
          %s1077 = sshll.u32 %s1066, 4
          %s1078 = int_to_ptr.vmem [resolvable:$true] %s1077
          %1080 = dma.vmem_to_hbm [thread:$0]  %s1078, 128, %s1075, %s1063
        $region60: #{tpu_custom_call.1} parent=43 // pred_fallthru
          _
      $region44: #{tpu_custom_call.1} parent=5 // pred_fallthru
        _
      %p1081 = scmp.le.s32.totalorder 2, %s19
      // Predicated region
      $region61: #{tpu_custom_call.1} parent=5 // pred_check
        %p1082 = pneg %p1081
      $region62: #{tpu_custom_call.1} parent=5 // pred_check_branch
        %1084 = sbr.rel (%p1082) target = $region64
      $region63: #{tpu_custom_call.1} parent=5 // pred_region
        %s1085 = ssub.s32 %s19, 2
        // Predicated region
        $region65: #{tpu_custom_call.1} parent=63 // pred_check
          %p1086 = pneg %p179
        $region66: #{tpu_custom_call.1} parent=63 // pred_check_branch
          %1088 = sbr.rel (%p1086) target = $region68
        $region67: #{tpu_custom_call.1} parent=63 // pred_region
          %s1089 = sand.u32 %s164, 1
          %s1090 = scalar_lea.sflag [#allocation5], %s1089
          %s1091 = sand.u32 %s164, 1
          %s1092 = smul.addr %s1091, 8
          %s1093 = scalar_lea.vmem [#allocation9], %s1092
          %1094 = dma.done %s1090, 128
        $region68: #{tpu_custom_call.1} parent=63 // pred_fallthru
          _
      $region64: #{tpu_custom_call.1} parent=5 // pred_fallthru
        _
    $region6: #{tpu_custom_call.1} parent=1 // loop_footer
      %s23 = sadd.s32 1, %s19
    $region7: #{tpu_custom_call.1} parent=1 // loop_footer_branch
      %18 = sbr.rel target = $region3
    $region8: #{tpu_custom_call.1} parent=1 // loop_exit
      _
    %1095 = vsyncpa [#allocation4], 1
    %s1096 = scalar_lea.sflag [#allocation4], 1
    %1097 = vsyncpa %s1096, 1
    %1098 = vsyncpa [#allocation7], 1
    %1099 = vsyncpa [#allocation5], 1
    %s1100 = scalar_lea.sflag [#allocation5], 1
    %1101 = vsyncpa %s1100, 1

</llo_original>
